<compile_context>
chip_gen: v5e
topology: v5e:2x2
jax: 0.10.0
libtpu: 0.0.40
codegen_flags: <defaults>
</compile_context>

<pallas_src>
import jax
import jax.numpy as jnp
from jax.experimental import pallas as pl
from jax.experimental.pallas import tpu as pltpu

NUM_OPTS = 5


def mc_answer_kernel(qcat_ref, opts_ref, wq_ref, bq_ref,
                     w1_ref, b1_ref, w2_ref, b2_ref, out_ref):
    # Fused projection: relu(concat(qoi, qi) @ [wqoi; wqi] + (bqoi + bqi))
    # bf16 x bf16 -> f32 accumulate on the MXU (no in-kernel weight upcast).
    M = jnp.maximum(
        jnp.dot(qcat_ref[...], wq_ref[...],
                preferred_element_type=jnp.float32) + bq_ref[...],
        0.0)                                               # [TB, hid] f32

    opts = opts_ref[...]                                   # [5, TB, hid] bf16, option-major
    n_opt, tb, hid = opts.shape
    # Broadcast M over options and flatten to a [5*TB, hid] bf16 slab.
    # TB is a multiple of 8, so the reshape is a layout no-op.
    X = (M.astype(jnp.bfloat16)[None, :, :] * opts).reshape(n_opt * tb, hid)

    # SimpleClassifier layer 1: one batched bf16 MXU matmul for all 5 options.
    H = jnp.maximum(
        jnp.dot(X, w1_ref[...],
                preferred_element_type=jnp.float32) + b1_ref[...],
        0.0)                                               # [5*TB, 512] f32
    # TODO(synk): nn.Dropout(0.5) is identity in eval mode; not applied here.

    # SimpleClassifier layer 2 (Linear(512, 1)) as VPU multiply + XLU lane
    # reduce; avoids an N=1 MXU matmul.  b2 is a scalar read from SMEM.
    logits = jnp.sum(H * w2_ref[...], axis=-1, keepdims=True) + b2_ref[0, 0]
    out_ref[...] = logits                                  # [5*TB, 1] option-major


def mc_answer_prediction(qoi, qi, opts, params, tile_b=8):
    B = qoi.shape[0]
    pad = (-B) % tile_b
    if pad:                                               # keep rows a multiple of 8
        qoi = jnp.pad(qoi, ((0, pad), (0, 0)))
        qi = jnp.pad(qi, ((0, pad), (0, 0)))
        opts = jnp.pad(opts, ((0, pad), (0, 0), (0, 0)))
    Bp = B + pad
    num_tiles = Bp // tile_b

    # Layout / dtype plumbing in the wrapper (plain XLA, cheap):
    qcat = jnp.concatenate([qoi, qi], axis=-1).astype(jnp.bfloat16)   # [Bp, qoi+qo]
    opts_om = jnp.transpose(opts, (1, 0, 2)).astype(jnp.bfloat16)     # [5, Bp, hid]

    qdim = qcat.shape[1]
    hid = opts_om.shape[2]
    clf_hid = params["w1"].shape[1]

    out = pl.pallas_call(
        mc_answer_kernel,
        out_shape=jax.ShapeDtypeStruct((num_tiles * NUM_OPTS * tile_b, 1),
                                       jnp.float32),
        grid=(num_tiles,),
        in_specs=[
            # Per-tile activations (pipelined under compute):
            pl.BlockSpec((tile_b, qdim), lambda i: (i, 0)),               # qcat
            pl.BlockSpec((NUM_OPTS, tile_b, hid), lambda i: (0, i, 0)),   # opts
            # Weights: constant block index => DMA'd once, VMEM-resident
            # across the whole grid.
            pl.BlockSpec((qdim, hid), lambda i: (0, 0)),                  # wq (bf16)
            pl.BlockSpec((1, hid), lambda i: (0, 0)),                     # bq (f32)
            pl.BlockSpec((hid, clf_hid), lambda i: (0, 0)),               # w1 (bf16)
            pl.BlockSpec((1, clf_hid), lambda i: (0, 0)),                 # b1 (f32)
            pl.BlockSpec((1, clf_hid), lambda i: (0, 0)),                 # w2 row (f32)
            pl.BlockSpec(memory_space=pltpu.MemorySpace.SMEM),            # b2 scalar
        ],
        out_specs=pl.BlockSpec((NUM_OPTS * tile_b, 1), lambda i: (i, 0)),
        compiler_params=pltpu.CompilerParams(
            dimension_semantics=("parallel",)),   # shards batch tiles on v7x's 2 TCs
    )(qcat, opts_om, params["wq"], params["bq"],
      params["w1"], params["b1"], params["w2"], params["b2"])

    # Rows: tile-major, then option-major, then row-in-tile.
    logits = out.reshape(num_tiles, NUM_OPTS, tile_b)
    logits = jnp.transpose(logits, (0, 2, 1)).reshape(Bp, NUM_OPTS)
    return logits[:B]                                      # [B, 5]


# ----------------------- parameter setup (plain-JAX glue) -----------------------

def _weight_norm_dim_none(v, g):
    # weight_norm with dim=None: W = g * V / ||V||_F   (g is a scalar)
    return g * v / jnp.sqrt(jnp.sum(v * v))


def _make_linear(kw, kb, in_d, out_d):
    # PyTorch Linear default init: U(-1/sqrt(in_d), 1/sqrt(in_d))
    bound = 1.0 / float(in_d) ** 0.5
    v = jax.random.uniform(kw, (out_d, in_d), jnp.float32, -bound, bound)
    b = jax.random.uniform(kb, (out_d,), jnp.float32, -bound, bound)
    g = jnp.sqrt(jnp.sum(v * v))          # weight_norm init sets g = ||V||_F
    w = _weight_norm_dim_none(v, g)       # effective weight [out, in]
    return w.T, b.reshape(1, out_d)       # -> [in, out] for x @ W, bias [1, out]


def init_params(key, qoi_dim, qo_dim, hid_dim, clf_hid=512):
    ks = jax.random.split(key, 8)
    wqoi, bqoi = _make_linear(ks[0], ks[1], qoi_dim, hid_dim)
    wqi, bqi = _make_linear(ks[2], ks[3], qo_dim, hid_dim)
    # project_opt = Linear(1024, hid_dim) exists in __init__ but is unused in forward.
    w1, b1 = _make_linear(ks[4], ks[5], hid_dim, clf_hid)   # classifier in_dim=1024==hid_dim
    w2, b2 = _make_linear(ks[6], ks[7], clf_hid, 1)         # w2: [512, 1], b2: [1, 1]
    # Fuse the two projections (sum happens BEFORE the ReLU in the module);
    # store the big weights in bf16 — they feed the MXU natively.
    wq = jnp.concatenate([wqoi, wqi], axis=0)               # [qoi+qo, hid]
    bq = bqoi + bqi                                         # [1, hid]
    return dict(wq=wq.astype(jnp.bfloat16), bq=bq,
                w1=w1.astype(jnp.bfloat16), b1=b1,
                w2=w2.reshape(1, clf_hid),                  # lane-dense row [1, 512] f32
                b2=b2)                                      # [1, 1] f32 scalar (SMEM)


def reference_forward(qoi, qi, opts, p):
    # Module-faithful structure (projections summed before ReLU, 5 classifier
    # calls) with the same dtype handling as the kernel (bf16 feeds, f32 accum).
    qcat = jnp.concatenate([qoi, qi], axis=-1).astype(jnp.bfloat16)
    M = jnp.maximum(
        jnp.dot(qcat, p["wq"], preferred_element_type=jnp.float32) + p["bq"], 0.0)
    outs = []
    for i in range(NUM_OPTS):
        x = M.astype(jnp.bfloat16) * opts[:, i, :].astype(jnp.bfloat16)
        h = jnp.maximum(
            jnp.dot(x, p["w1"], preferred_element_type=jnp.float32) + p["b1"], 0.0)
        outs.append(jnp.sum(h * p["w2"], axis=-1, keepdims=True) + p["b2"][0, 0])
    return jnp.concatenate(outs, axis=-1)


if __name__ == "__main__":
    # hid_dim = 1024 is forced by the module (classifier in_dim hard-coded to 1024).
    B, QOI_DIM, QO_DIM, HID_DIM = 16, 32, 48, 1024
    TILE_B = 8                                              # -> grid of 2 batch tiles

    key = jax.random.PRNGKey(0)
    k_qoi, k_qi, k_opts, k_params = jax.random.split(key, 4)

    qoi = jax.random.normal(k_qoi, (B, QOI_DIM), jnp.float32)
    qi = jax.random.normal(k_qi, (B, QO_DIM), jnp.float32)
    opts = jax.random.normal(k_opts, (B, NUM_OPTS, HID_DIM), jnp.float32)
    params = init_params(k_params, QOI_DIM, QO_DIM, HID_DIM)

    logits = mc_answer_prediction(qoi, qi, opts, params, tile_b=TILE_B)
    logits = jax.block_until_ready(logits)

    ref = reference_forward(qoi, qi, opts, params)
    assert logits.shape == (B, NUM_OPTS)
    # Kernel and reference share the same bf16 feed points + f32 accumulation,
    # so only accumulation-order noise remains.
    assert jnp.allclose(logits, ref, atol=2e-3, rtol=2e-3), "mismatch vs JAX reference"

    print("KERNEL_OK")
</pallas_src>

<mosaic_0001>
module attributes {stable_mosaic.version = 11 : i64} {
  func.func @mc_answer_kernel(%arg0: i32, %arg1: memref<8x80xbf16, #tpu.memory_space<vmem>>, %arg2: memref<5x8x1024xbf16, #tpu.memory_space<vmem>>, %arg3: memref<80x1024xbf16, #tpu.memory_space<vmem>>, %arg4: memref<1x1024xf32, #tpu.memory_space<vmem>>, %arg5: memref<1024x512xbf16, #tpu.memory_space<vmem>>, %arg6: memref<1x512xf32, #tpu.memory_space<vmem>>, %arg7: memref<1x512xf32, #tpu.memory_space<vmem>>, %arg8: memref<1x1xf32, #tpu.memory_space<smem>>, %arg9: memref<40x1xf32, #tpu.memory_space<vmem>>) attributes {dimension_semantics = [#tpu.dimension_semantics<parallel>], iteration_bounds = array<i64: 2>, scalar_prefetch = 0 : i64, scratch_operands = 0 : i64, tpu.core_type = #tpu.core_type<tc>, window_params = [{transform_indices = @transform_0, window_bounds = array<i64: 8, 80>}, {transform_indices = @transform_1, window_bounds = array<i64: 5, 8, 1024>}, {pipeline_mode = #tpu.pipeline_mode<synchronous>, transform_indices = @transform_2, window_bounds = array<i64: 80, 1024>}, {pipeline_mode = #tpu.pipeline_mode<synchronous>, transform_indices = @transform_3, window_bounds = array<i64: 1, 1024>}, {pipeline_mode = #tpu.pipeline_mode<synchronous>, transform_indices = @transform_4, window_bounds = array<i64: 1024, 512>}, {pipeline_mode = #tpu.pipeline_mode<synchronous>, transform_indices = @transform_5, window_bounds = array<i64: 1, 512>}, {pipeline_mode = #tpu.pipeline_mode<synchronous>, transform_indices = @transform_6, window_bounds = array<i64: 1, 512>}, {transform_indices = @transform_7, window_bounds = array<i64: 1, 1>}, {transform_indices = @transform_8, window_bounds = array<i64: 40, 1>}]} {
    %c0 = arith.constant 0 : index
    %c0_0 = arith.constant 0 : index
    %0 = vector.load %arg1[%c0, %c0_0] : memref<8x80xbf16, #tpu.memory_space<vmem>>, vector<8x80xbf16>
    %c0_1 = arith.constant 0 : index
    %c0_2 = arith.constant 0 : index
    %1 = vector.load %arg3[%c0_1, %c0_2] : memref<80x1024xbf16, #tpu.memory_space<vmem>>, vector<80x1024xbf16>
    %cst = arith.constant dense<0.000000e+00> : vector<8x1024xf32>
    %2 = tpu.matmul %0, %1, %cst {dimension_numbers = #tpu.dot_dimension_numbers<[1], [0], [0], [1], [0, 0, 1, 1], [], []>} : vector<8x80xbf16>, vector<80x1024xbf16>, vector<8x1024xf32> -> vector<8x1024xf32>
    %c0_3 = arith.constant 0 : index
    %c0_4 = arith.constant 0 : index
    %3 = vector.load %arg4[%c0_3, %c0_4] : memref<1x1024xf32, #tpu.memory_space<vmem>>, vector<1x1024xf32>
    %4 = vector.broadcast %3 : vector<1x1024xf32> to vector<8x1024xf32>
    %5 = arith.addf %2, %4 : vector<8x1024xf32>
    %cst_5 = arith.constant 0.000000e+00 : f32
    %6 = vector.broadcast %cst_5 : f32 to vector<8x1024xf32>
    %7 = arith.maximumf %5, %6 : vector<8x1024xf32>
    %c0_6 = arith.constant 0 : index
    %c0_7 = arith.constant 0 : index
    %c0_8 = arith.constant 0 : index
    %8 = vector.load %arg2[%c0_6, %c0_7, %c0_8] : memref<5x8x1024xbf16, #tpu.memory_space<vmem>>, vector<5x8x1024xbf16>
    %9 = arith.truncf %7 : vector<8x1024xf32> to vector<8x1024xbf16>
    %10 = vector.shape_cast %9 : vector<8x1024xbf16> to vector<1x8x1024xbf16>
    %11 = vector.broadcast %10 : vector<1x8x1024xbf16> to vector<5x8x1024xbf16>
    %12 = arith.mulf %11, %8 : vector<5x8x1024xbf16>
    %13 = vector.shape_cast %12 : vector<5x8x1024xbf16> to vector<40x1024xbf16>
    %c0_9 = arith.constant 0 : index
    %c0_10 = arith.constant 0 : index
    %14 = vector.load %arg5[%c0_9, %c0_10] : memref<1024x512xbf16, #tpu.memory_space<vmem>>, vector<1024x512xbf16>
    %cst_11 = arith.constant dense<0.000000e+00> : vector<40x512xf32>
    %15 = tpu.matmul %13, %14, %cst_11 {dimension_numbers = #tpu.dot_dimension_numbers<[1], [0], [0], [1], [0, 0, 1, 1], [], []>} : vector<40x1024xbf16>, vector<1024x512xbf16>, vector<40x512xf32> -> vector<40x512xf32>
    %c0_12 = arith.constant 0 : index
    %c0_13 = arith.constant 0 : index
    %16 = vector.load %arg6[%c0_12, %c0_13] : memref<1x512xf32, #tpu.memory_space<vmem>>, vector<1x512xf32>
    %17 = vector.broadcast %16 : vector<1x512xf32> to vector<40x512xf32>
    %18 = arith.addf %15, %17 : vector<40x512xf32>
    %cst_14 = arith.constant 0.000000e+00 : f32
    %19 = vector.broadcast %cst_14 : f32 to vector<40x512xf32>
    %20 = arith.maximumf %18, %19 : vector<40x512xf32>
    %c0_15 = arith.constant 0 : index
    %c0_16 = arith.constant 0 : index
    %21 = vector.load %arg7[%c0_15, %c0_16] : memref<1x512xf32, #tpu.memory_space<vmem>>, vector<1x512xf32>
    %22 = vector.broadcast %21 : vector<1x512xf32> to vector<40x512xf32>
    %23 = arith.mulf %20, %22 : vector<40x512xf32>
    %cst_17 = arith.constant dense<0.000000e+00> : vector<40xf32>
    %24 = vector.multi_reduction <add>, %23, %cst_17 [1] : vector<40x512xf32> to vector<40xf32>
    %25 = vector.shape_cast %24 : vector<40xf32> to vector<40x1xf32>
    %c0_18 = arith.constant 0 : index
    %c0_19 = arith.constant 0 : index
    %26 = memref.load %arg8[%c0_18, %c0_19] : memref<1x1xf32, #tpu.memory_space<smem>>
    %27 = vector.broadcast %26 : f32 to vector<40x1xf32>
    %28 = arith.addf %25, %27 : vector<40x1xf32>
    %c0_20 = arith.constant 0 : index
    %c0_21 = arith.constant 0 : index
    %29 = vector.load %arg9[%c0_20, %c0_21] : memref<40x1xf32, #tpu.memory_space<vmem>>, vector<40x1xf32>
    tpu.vector_store %arg9[%c0_20, %c0_21], %28 {strides = array<i32>} : memref<40x1xf32, #tpu.memory_space<vmem>>, vector<40x1xf32>,
    return
  }
  func.func @transform_0(%arg0: i32) -> (i32, i32) {
    %c0_i32 = arith.constant 0 : i32
    %c0_i32_0 = arith.constant 0 : i32
    return %arg0, %c0_i32 : i32, i32
  }
  func.func @transform_1(%arg0: i32) -> (i32, i32, i32) {
    %c0_i32 = arith.constant 0 : i32
    %c0_i32_0 = arith.constant 0 : i32
    %c0_i32_1 = arith.constant 0 : i32
    return %c0_i32, %arg0, %c0_i32_0 : i32, i32, i32
  }
  func.func @transform_2(%arg0: i32) -> (i32, i32) {
    %c0_i32 = arith.constant 0 : i32
    %c0_i32_0 = arith.constant 0 : i32
    %c0_i32_1 = arith.constant 0 : i32
    return %c0_i32, %c0_i32_0 : i32, i32
  }
  func.func @transform_3(%arg0: i32) -> (i32, i32) {
    %c0_i32 = arith.constant 0 : i32
    %c0_i32_0 = arith.constant 0 : i32
    %c0_i32_1 = arith.constant 0 : i32
    return %c0_i32, %c0_i32_0 : i32, i32
  }
  func.func @transform_4(%arg0: i32) -> (i32, i32) {
    %c0_i32 = arith.constant 0 : i32
    %c0_i32_0 = arith.constant 0 : i32
    %c0_i32_1 = arith.constant 0 : i32
    return %c0_i32, %c0_i32_0 : i32, i32
  }
  func.func @transform_5(%arg0: i32) -> (i32, i32) {
    %c0_i32 = arith.constant 0 : i32
    %c0_i32_0 = arith.constant 0 : i32
    %c0_i32_1 = arith.constant 0 : i32
    return %c0_i32, %c0_i32_0 : i32, i32
  }
  func.func @transform_6(%arg0: i32) -> (i32, i32) {
    %c0_i32 = arith.constant 0 : i32
    %c0_i32_0 = arith.constant 0 : i32
    %c0_i32_1 = arith.constant 0 : i32
    return %c0_i32, %c0_i32_0 : i32, i32
  }
  func.func @transform_7(%arg0: i32) -> (i32, i32) {
    %c0_i32 = arith.constant 0 : i32
    %c0_i32_0 = arith.constant 0 : i32
    %c0_i32_1 = arith.constant 0 : i32
    return %c0_i32, %c0_i32_0 : i32, i32
  }
  func.func @transform_8(%arg0: i32) -> (i32, i32) {
    %c0_i32 = arith.constant 0 : i32
    %c0_i32_0 = arith.constant 0 : i32
    return %arg0, %c0_i32 : i32, i32
  }
}

</mosaic_0001>

<llo_original>
// kernel: tpu_custom_call.1
$region0: #{tpu_custom_call.1}
  #allocation0 [shape = 'u32[]', space=smem, size = 0x4, offset = 0x4, fixed_abs, tag = 'smem constant byte address 0x4 - core index']
  #allocation1 [shape = 'u32[72,128]{1,0:T(1,128)}', space=vmem, size = 0x9000, scoped, tag = 'internal scratch']
  #allocation2 [shape = 'f32[1,1]{1,0:T(1,128)S(6)}', space=smem, size = 0x200, scoped, tag = 'scoped memory for tpu_custom_call.1']
  %s0 = inlined_call_operand.hbm [shape: bf16[16,80], index: 0, kind: input, shape index: {}]
  %s1 = inlined_call_operand.hbm [shape: bf16[5,16,1024], index: 1, kind: input, shape index: {}]
  %s2 = inlined_call_operand.hbm [shape: bf16[80,1024], index: 2, kind: input, shape index: {}]
  %s3 = inlined_call_operand.hbm [shape: f32[1,1024], index: 3, kind: input, shape index: {}]
  %s4 = inlined_call_operand.hbm [shape: bf16[1024,512], index: 4, kind: input, shape index: {}]
  %s5 = inlined_call_operand.vmem [shape: f32[1,512], index: 5, kind: input, shape index: {}]
  %s6 = inlined_call_operand.hbm [shape: f32[1,512], index: 6, kind: input, shape index: {}]
  %s7 = inlined_call_operand.<no memory space> [shape: f32[1,1], index: 7, kind: input, shape index: {}]
  %s8 = inlined_call_operand.vmem [shape: f32[80,1], index: 8, kind: output, shape index: {}]
  %s9 = sld [smem:[#allocation0]]
  $region89: #{tpu_custom_call.1} parent=0
    _
  %s11 = ssub.s32 1, %s9
  %s12 = scalar_select 0, %s11, %s9
  %13 = sst [smem:[#allocation2]] %s7
  $region1: #{tpu_custom_call.1} parent=0
    #allocation3 [shape = 'u8[4096]{0}', space=vmem, size = 0x1000, scoped, tag = 'input window, operand 0']
    #allocation4 [shape = 's32[2]{0}', space=sflag, size = 0x8, scoped, tag = 'scoped memory for tpu_custom_call.1']
    #allocation5 [shape = 'u8[163840]{0}', space=vmem, size = 0x28000, scoped, tag = 'input window, operand 1']
    #allocation6 [shape = 's32[2]{0}', space=sflag, size = 0x8, scoped, tag = 'scoped memory for tpu_custom_call.1']
    #allocation7 [shape = 'u8[163840]{0}', space=vmem, size = 0x28000, scoped, tag = 'input window, operand 2, single buffered']
    #allocation8 [shape = 'u8[4096]{0}', space=vmem, size = 0x1000, scoped, tag = 'input window, operand 3, single buffered']
    #allocation9 [shape = 's32[1]{0}', space=sflag, size = 0x4, scoped, tag = 'scoped memory for tpu_custom_call.1']
    #allocation10 [shape = 'u8[1048576]{0}', space=vmem, size = 0x100000, scoped, tag = 'input window, operand 4, single buffered']
    #allocation11 [shape = 'u8[2048]{0}', space=vmem, size = 0x800, scoped, tag = 'input window, operand 6, single buffered']
    #allocation12 [shape = 's32[1]{0}', space=sflag, size = 0x4, scoped, tag = 'scoped memory for tpu_custom_call.1']
    %14 = vsyncpa [#allocation4], 0
    %s15 = scalar_lea.sflag [#allocation4], 1
    %16 = vsyncpa %s15, 0
    %17 = vsyncpa [#allocation6], 0
    %s18 = scalar_lea.sflag [#allocation6], 1
    %19 = vsyncpa %s18, 0
    %20 = vsyncpa [#allocation9], 0
    %21 = vsyncpa [#allocation12], 0
    loop: start=0, step=1, limit=4
    $region2: #{tpu_custom_call.1} parent=1 // loop_pre_header
      _
    $region3: #{tpu_custom_call.1} parent=1 // loop_header
      %s23 = sphi 0, %s27
      %p24 = scmp.ge.s32.totalorder %s23, 4
      %s33 = sphi 0, %s35
      %s36 = sphi 0, %s33
      %s37 = sphi 0, %s36
      %s53 = sphi 0, %s37
      %s59 = sphi 0, %s61
      %s62 = sphi 0, %s59
      %s63 = sphi 0, %s62
      %s79 = sphi 0, %s63
      %s83 = sphi 0, %s83
      %s85 = sphi 0, %s83
      %s86 = sphi 0, %s85
      %s100 = sphi 0, %s86
      %s104 = sphi 0, %s104
      %s106 = sphi 0, %s104
      %s107 = sphi 0, %s106
      %s121 = sphi 0, %s107
      %s125 = sphi 0, %s125
      %s127 = sphi 0, %s125
      %s128 = sphi 0, %s127
      %s142 = sphi 0, %s128
      %s146 = sphi 0, %s146
      %s148 = sphi 0, %s146
      %s149 = sphi 0, %s148
      %s163 = sphi 0, %s149
      %s167 = sphi 0, %s167
      %s169 = sphi 0, %s167
      %s170 = sphi 0, %s169
      %s184 = sphi 0, %s170
      %s188 = sphi 0, %s188
      %s190 = sphi 0, %s188
      %s191 = sphi 0, %s190
      %s205 = sphi 0, %s191
      %s211 = sphi 0, %s213
      %s214 = sphi 0, %s211
      %s215 = sphi 0, %s214
      %s231 = sphi 0, %s215
    $region4: #{tpu_custom_call.1} parent=1 // loop_header_branch
      %26 = sbr.rel (%p24) target = $region8
    $region5: #{tpu_custom_call.1} parent=1 // loop_body
      %s28 = ssub.s32 %s23, 1
      %s29 = ssub.s32 %s23, 2
      %s30 = sadd.s32 %s23, 1
      %s31 = ssub.s32 %s23, %s30
      %p32 = scmp.eq.s32.totalorder %s31, 0
      %s34 = sadd.s32 %s33, 1
      %s35 = scalar_select %p32, %s33, %s34
      %p38 = pneg %p32
      %p39 = scmp.eq.s32.totalorder %s23, 1
      %p40 = por %p38, %p39
      %p41 = scmp.ne.s32.totalorder %s33, %s36
      %p42 = scmp.eq.s32.totalorder %s23, 0
      %p43 = por %p41, %p42
      %p44 = scmp.ne.s32.totalorder %s33, %s36
      %p45 = scmp.eq.s32.totalorder %s28, 1
      %p46 = por %p44, %p45
      %p47 = scmp.ne.s32.totalorder %s36, %s37
      %p48 = scmp.eq.s32.totalorder %s28, 0
      %p49 = por %p47, %p48
      %p50 = scmp.ne.s32.totalorder %s36, %s37
      %p51 = scmp.eq.s32.totalorder %s29, 1
      %p52 = por %p50, %p51
      %p54 = scmp.ne.s32.totalorder %s37, %s53
      %p55 = scmp.eq.s32.totalorder %s29, 0
      %p56 = por %p54, %p55
      %s57 = ssub.s32 %s23, %s30
      %p58 = scmp.eq.s32.totalorder %s57, 0
      %s60 = sadd.s32 %s59, 1
      %s61 = scalar_select %p58, %s59, %s60
      %p64 = pneg %p58
      %p65 = scmp.eq.s32.totalorder %s23, 1
      %p66 = por %p64, %p65
      %p67 = scmp.ne.s32.totalorder %s59, %s62
      %p68 = scmp.eq.s32.totalorder %s23, 0
      %p69 = por %p67, %p68
      %p70 = scmp.ne.s32.totalorder %s59, %s62
      %p71 = scmp.eq.s32.totalorder %s28, 1
      %p72 = por %p70, %p71
      %p73 = scmp.ne.s32.totalorder %s62, %s63
      %p74 = scmp.eq.s32.totalorder %s28, 0
      %p75 = por %p73, %p74
      %p76 = scmp.ne.s32.totalorder %s62, %s63
      %p77 = scmp.eq.s32.totalorder %s29, 1
      %p78 = por %p76, %p77
      %p80 = scmp.ne.s32.totalorder %s63, %s79
      %p81 = scmp.eq.s32.totalorder %s29, 0
      %p82 = por %p80, %p81
      %s84 = sadd.s32 %s83, 1
      %p87 = scmp.eq.s32.totalorder %s23, 1
      %p88 = scmp.ne.s32.totalorder %s83, %s85
      %p89 = scmp.eq.s32.totalorder %s23, 0
      %p90 = por %p88, %p89
      %p91 = scmp.ne.s32.totalorder %s83, %s85
      %p92 = scmp.eq.s32.totalorder %s28, 1
      %p93 = por %p91, %p92
      %p94 = scmp.ne.s32.totalorder %s85, %s86
      %p95 = scmp.eq.s32.totalorder %s28, 0
      %p96 = por %p94, %p95
      %p97 = scmp.ne.s32.totalorder %s85, %s86
      %p98 = scmp.eq.s32.totalorder %s29, 1
      %p99 = por %p97, %p98
      %p101 = scmp.ne.s32.totalorder %s86, %s100
      %p102 = scmp.eq.s32.totalorder %s29, 0
      %p103 = por %p101, %p102
      %s105 = sadd.s32 %s104, 1
      %p108 = scmp.eq.s32.totalorder %s23, 1
      %p109 = scmp.ne.s32.totalorder %s104, %s106
      %p110 = scmp.eq.s32.totalorder %s23, 0
      %p111 = por %p109, %p110
      %p112 = scmp.ne.s32.totalorder %s104, %s106
      %p113 = scmp.eq.s32.totalorder %s28, 1
      %p114 = por %p112, %p113
      %p115 = scmp.ne.s32.totalorder %s106, %s107
      %p116 = scmp.eq.s32.totalorder %s28, 0
      %p117 = por %p115, %p116
      %p118 = scmp.ne.s32.totalorder %s106, %s107
      %p119 = scmp.eq.s32.totalorder %s29, 1
      %p120 = por %p118, %p119
      %p122 = scmp.ne.s32.totalorder %s107, %s121
      %p123 = scmp.eq.s32.totalorder %s29, 0
      %p124 = por %p122, %p123
      %s126 = sadd.s32 %s125, 1
      %p129 = scmp.eq.s32.totalorder %s23, 1
      %p130 = scmp.ne.s32.totalorder %s125, %s127
      %p131 = scmp.eq.s32.totalorder %s23, 0
      %p132 = por %p130, %p131
      %p133 = scmp.ne.s32.totalorder %s125, %s127
      %p134 = scmp.eq.s32.totalorder %s28, 1
      %p135 = por %p133, %p134
      %p136 = scmp.ne.s32.totalorder %s127, %s128
      %p137 = scmp.eq.s32.totalorder %s28, 0
      %p138 = por %p136, %p137
      %p139 = scmp.ne.s32.totalorder %s127, %s128
      %p140 = scmp.eq.s32.totalorder %s29, 1
      %p141 = por %p139, %p140
      %p143 = scmp.ne.s32.totalorder %s128, %s142
      %p144 = scmp.eq.s32.totalorder %s29, 0
      %p145 = por %p143, %p144
      %s147 = sadd.s32 %s146, 1
      %p150 = scmp.eq.s32.totalorder %s23, 1
      %p151 = scmp.ne.s32.totalorder %s146, %s148
      %p152 = scmp.eq.s32.totalorder %s23, 0
      %p153 = por %p151, %p152
      %p154 = scmp.ne.s32.totalorder %s146, %s148
      %p155 = scmp.eq.s32.totalorder %s28, 1
      %p156 = por %p154, %p155
      %p157 = scmp.ne.s32.totalorder %s148, %s149
      %p158 = scmp.eq.s32.totalorder %s28, 0
      %p159 = por %p157, %p158
      %p160 = scmp.ne.s32.totalorder %s148, %s149
      %p161 = scmp.eq.s32.totalorder %s29, 1
      %p162 = por %p160, %p161
      %p164 = scmp.ne.s32.totalorder %s149, %s163
      %p165 = scmp.eq.s32.totalorder %s29, 0
      %p166 = por %p164, %p165
      %s168 = sadd.s32 %s167, 1
      %p171 = scmp.eq.s32.totalorder %s23, 1
      %p172 = scmp.ne.s32.totalorder %s167, %s169
      %p173 = scmp.eq.s32.totalorder %s23, 0
      %p174 = por %p172, %p173
      %p175 = scmp.ne.s32.totalorder %s167, %s169
      %p176 = scmp.eq.s32.totalorder %s28, 1
      %p177 = por %p175, %p176
      %p178 = scmp.ne.s32.totalorder %s169, %s170
      %p179 = scmp.eq.s32.totalorder %s28, 0
      %p180 = por %p178, %p179
      %p181 = scmp.ne.s32.totalorder %s169, %s170
      %p182 = scmp.eq.s32.totalorder %s29, 1
      %p183 = por %p181, %p182
      %p185 = scmp.ne.s32.totalorder %s170, %s184
      %p186 = scmp.eq.s32.totalorder %s29, 0
      %p187 = por %p185, %p186
      %s189 = sadd.s32 %s188, 1
      %p192 = scmp.eq.s32.totalorder %s23, 1
      %p193 = scmp.ne.s32.totalorder %s188, %s190
      %p194 = scmp.eq.s32.totalorder %s23, 0
      %p195 = por %p193, %p194
      %p196 = scmp.ne.s32.totalorder %s188, %s190
      %p197 = scmp.eq.s32.totalorder %s28, 1
      %p198 = por %p196, %p197
      %p199 = scmp.ne.s32.totalorder %s190, %s191
      %p200 = scmp.eq.s32.totalorder %s28, 0
      %p201 = por %p199, %p200
      %p202 = scmp.ne.s32.totalorder %s190, %s191
      %p203 = scmp.eq.s32.totalorder %s29, 1
      %p204 = por %p202, %p203
      %p206 = scmp.ne.s32.totalorder %s191, %s205
      %p207 = scmp.eq.s32.totalorder %s29, 0
      %p208 = por %p206, %p207
      %s209 = ssub.s32 %s23, %s30
      %p210 = scmp.eq.s32.totalorder %s209, 0
      %s212 = sadd.s32 %s211, 1
      %s213 = scalar_select %p210, %s211, %s212
      %p216 = pneg %p210
      %p217 = scmp.eq.s32.totalorder %s23, 1
      %p218 = por %p216, %p217
      %p219 = scmp.ne.s32.totalorder %s211, %s214
      %p220 = scmp.eq.s32.totalorder %s23, 0
      %p221 = por %p219, %p220
      %p222 = scmp.ne.s32.totalorder %s211, %s214
      %p223 = scmp.eq.s32.totalorder %s28, 1
      %p224 = por %p222, %p223
      %p225 = scmp.ne.s32.totalorder %s214, %s215
      %p226 = scmp.eq.s32.totalorder %s28, 0
      %p227 = por %p225, %p226
      %p228 = scmp.ne.s32.totalorder %s214, %s215
      %p229 = scmp.eq.s32.totalorder %s29, 1
      %p230 = por %p228, %p229
      %p232 = scmp.ne.s32.totalorder %s215, %s231
      %p233 = scmp.eq.s32.totalorder %s29, 0
      %p234 = por %p232, %p233
      %p235 = scmp.le.s32.totalorder 1, %s23
      %p236 = scmp.lt.s32.totalorder %s23, 3
      %p237 = pnand %p235, %p236
      %p238 = pneg %p237
      // Predicated region
      $region9: #{tpu_custom_call.1} parent=5 // pred_check
        _
      $region10: #{tpu_custom_call.1} parent=5 // pred_check_branch
        %240 = sbr.rel (%p237) target = $region12
      $region11: #{tpu_custom_call.1} parent=5 // pred_region
        %s241 = ssub.s32 %s23, 1
        // Predicated region
        $region13: #{tpu_custom_call.1} parent=11 // pred_check
          %p242 = pneg %p96
        $region14: #{tpu_custom_call.1} parent=11 // pred_check_branch
          %244 = sbr.rel (%p242) target = $region16
        $region15: #{tpu_custom_call.1} parent=11 // pred_region
          %246 = vsyncadd [#allocation6], 0
          %s247 = sshll.u32 %s2, 4
          %s248 = int_to_ptr.hbm [resolvable:$true] %s247
          %s249 = sshll.u32 [#allocation7], 4
          %s250 = int_to_ptr.vmem [resolvable:$true] %s249
          %255 = dma.hbm_to_vmem [thread:$0]  %s248, 5120, %s250, [#allocation6], 512, 512, 32
        $region16: #{tpu_custom_call.1} parent=11 // pred_fallthru
          _
        // Predicated region
        $region17: #{tpu_custom_call.1} parent=11 // pred_check
          %p256 = pneg %p117
        $region18: #{tpu_custom_call.1} parent=11 // pred_check_branch
          %258 = sbr.rel (%p256) target = $region20
        $region19: #{tpu_custom_call.1} parent=11 // pred_region
          %260 = vsyncadd [#allocation9], 0
          %s262 = sshll.u32 %s3, 4
          %s263 = int_to_ptr.hbm [resolvable:$true] %s262
          %s264 = sshll.u32 [#allocation8], 4
          %s265 = int_to_ptr.vmem [resolvable:$true] %s264
          %267 = dma.hbm_to_vmem [thread:$0]  %s263, 128, %s265, [#allocation9]
        $region20: #{tpu_custom_call.1} parent=11 // pred_fallthru
          _
        // Predicated region
        $region21: #{tpu_custom_call.1} parent=11 // pred_check
          %p268 = pneg %p138
        $region22: #{tpu_custom_call.1} parent=11 // pred_check_branch
          %270 = sbr.rel (%p268) target = $region24
        $region23: #{tpu_custom_call.1} parent=11 // pred_region
          %272 = vsyncadd [#allocation9], 0
          %s273 = sshll.u32 %s4, 4
          %s274 = int_to_ptr.hbm [resolvable:$true] %s273
          %s275 = sshll.u32 [#allocation10], 4
          %s276 = int_to_ptr.vmem [resolvable:$true] %s275
          %281 = dma.hbm_to_vmem [thread:$0]  %s274, 32768, %s276, [#allocation9], 256, 256, 16
        $region24: #{tpu_custom_call.1} parent=11 // pred_fallthru
          _
        // Predicated region
        $region25: #{tpu_custom_call.1} parent=11 // pred_check
          %p282 = pneg %p159
        $region26: #{tpu_custom_call.1} parent=11 // pred_check_branch
          %284 = sbr.rel (%p282) target = $region28
        $region27: #{tpu_custom_call.1} parent=11 // pred_region
          _
        $region28: #{tpu_custom_call.1} parent=11 // pred_fallthru
          _
        // Predicated region
        $region29: #{tpu_custom_call.1} parent=11 // pred_check
          %p285 = pneg %p180
        $region30: #{tpu_custom_call.1} parent=11 // pred_check_branch
          %287 = sbr.rel (%p285) target = $region32
        $region31: #{tpu_custom_call.1} parent=11 // pred_region
          %289 = vsyncadd [#allocation12], 0
          %s291 = sshll.u32 %s6, 4
          %s292 = int_to_ptr.hbm [resolvable:$true] %s291
          %s293 = sshll.u32 [#allocation11], 4
          %s294 = int_to_ptr.vmem [resolvable:$true] %s293
          %296 = dma.hbm_to_vmem [thread:$0]  %s292, 64, %s294, [#allocation12]
        $region32: #{tpu_custom_call.1} parent=11 // pred_fallthru
          _
        // Predicated region
        $region33: #{tpu_custom_call.1} parent=11 // pred_check
          %p297 = pneg %p201
        $region34: #{tpu_custom_call.1} parent=11 // pred_check_branch
          %299 = sbr.rel (%p297) target = $region36
        $region35: #{tpu_custom_call.1} parent=11 // pred_region
          _
        $region36: #{tpu_custom_call.1} parent=11 // pred_fallthru
          _
      $region12: #{tpu_custom_call.1} parent=5 // pred_fallthru
        _
      %p300 = scmp.lt.s32.totalorder %s23, 2
      // Predicated region
      $region37: #{tpu_custom_call.1} parent=5 // pred_check
        %p301 = pneg %p300
      $region38: #{tpu_custom_call.1} parent=5 // pred_check_branch
        %303 = sbr.rel (%p301) target = $region40
      $region39: #{tpu_custom_call.1} parent=5 // pred_region
        // Predicated region
        $region41: #{tpu_custom_call.1} parent=39 // pred_check
          %p304 = pneg %p43
        $region42: #{tpu_custom_call.1} parent=39 // pred_check_branch
          %306 = sbr.rel (%p304) target = $region44
        $region43: #{tpu_custom_call.1} parent=39 // pred_region
          %s307 = sand.u32 %s33, 1
          %s308 = scalar_lea.sflag [#allocation4], %s307
          %s309 = sand.u32 %s33, 1
          %s310 = smul.addr %s309, 4
          %s311 = scalar_lea.vmem [#allocation3], %s310
          %313 = vsyncadd %s308, 0
          %s314 = smul.addr %s23, 4
          %s315 = scalar_lea.hbm %s0, %s314
          %s317 = sshll.u32 %s315, 4
          %s318 = int_to_ptr.hbm [resolvable:$true] %s317
          %s319 = sshll.u32 %s311, 4
          %s320 = int_to_ptr.vmem [resolvable:$true] %s319
          %322 = dma.hbm_to_vmem [thread:$0]  %s318, 64, %s320, %s308
        $region44: #{tpu_custom_call.1} parent=39 // pred_fallthru
          _
        // Predicated region
        $region45: #{tpu_custom_call.1} parent=39 // pred_check
          %p323 = pneg %p69
        $region46: #{tpu_custom_call.1} parent=39 // pred_check_branch
          %325 = sbr.rel (%p323) target = $region48
        $region47: #{tpu_custom_call.1} parent=39 // pred_region
          %s326 = sand.u32 %s23, 1
          %s327 = scalar_lea.sflag [#allocation6], %s326
          %s328 = sand.u32 %s59, 1
          %s329 = smul.addr %s328, 160
          %s330 = scalar_lea.vmem [#allocation5], %s329
          %332 = vsyncadd %s327, 0
          %s333 = smul.addr %s23, 8
          %s334 = smul.addr %s333, 4
          %s335 = scalar_lea.hbm %s1, %s334
          %s336 = sshll.u32 %s335, 4
          %s337 = int_to_ptr.hbm [resolvable:$true] %s336
          %s338 = sshll.u32 %s330, 4
          %s339 = int_to_ptr.vmem [resolvable:$true] %s338
          %344 = dma.hbm_to_vmem [thread:$0]  %s337, 2560, %s339, %s327, 1024, 512, 32
        $region48: #{tpu_custom_call.1} parent=39 // pred_fallthru
          _
      $region40: #{tpu_custom_call.1} parent=5 // pred_fallthru
        _
      %p345 = scmp.le.s32.totalorder 1, %s23
      %p346 = scmp.lt.s32.totalorder %s23, 3
      %p347 = pnand %p345, %p346
      %p348 = pneg %p347
      // Predicated region
      $region49: #{tpu_custom_call.1} parent=5 // pred_check
        _
      $region50: #{tpu_custom_call.1} parent=5 // pred_check_branch
        %350 = sbr.rel (%p347) target = $region52
      $region51: #{tpu_custom_call.1} parent=5 // pred_region
        %s351 = ssub.s32 %s23, 1
        %s352 = sand.u32 %s36, 1
        %s353 = scalar_lea.sflag [#allocation4], %s352
        %s354 = sand.u32 %s36, 1
        %s355 = smul.addr %s354, 4
        %s356 = scalar_lea.vmem [#allocation3], %s355
        // Predicated region
        $region53: #{tpu_custom_call.1} parent=51 // pred_check
          %p357 = pneg %p49
        $region54: #{tpu_custom_call.1} parent=51 // pred_check_branch
          %359 = sbr.rel (%p357) target = $region56
        $region55: #{tpu_custom_call.1} parent=51 // pred_region
          %361 = dma.done %s353, 64
        $region56: #{tpu_custom_call.1} parent=51 // pred_fallthru
          _
        %s362 = sand.u32 %s28, 1
        %s363 = scalar_lea.sflag [#allocation6], %s362
        %s364 = sand.u32 %s62, 1
        %s365 = smul.addr %s364, 160
        %s366 = scalar_lea.vmem [#allocation5], %s365
        // Predicated region
        $region57: #{tpu_custom_call.1} parent=51 // pred_check
          %p367 = pneg %p75
        $region58: #{tpu_custom_call.1} parent=51 // pred_check_branch
          %369 = sbr.rel (%p367) target = $region60
        $region59: #{tpu_custom_call.1} parent=51 // pred_region
          %371 = dma.done %s363, 2560
        $region60: #{tpu_custom_call.1} parent=51 // pred_fallthru
          _
        // Predicated region
        $region61: #{tpu_custom_call.1} parent=51 // pred_check
          %p372 = pneg %p96
        $region62: #{tpu_custom_call.1} parent=51 // pred_check_branch
          %374 = sbr.rel (%p372) target = $region64
        $region63: #{tpu_custom_call.1} parent=51 // pred_region
          %376 = dma.done [#allocation6], 5120
        $region64: #{tpu_custom_call.1} parent=51 // pred_fallthru
          _
        // Predicated region
        $region65: #{tpu_custom_call.1} parent=51 // pred_check
          %p377 = pneg %p117
        $region66: #{tpu_custom_call.1} parent=51 // pred_check_branch
          %379 = sbr.rel (%p377) target = $region68
        $region67: #{tpu_custom_call.1} parent=51 // pred_region
          %381 = dma.done [#allocation9], 128
        $region68: #{tpu_custom_call.1} parent=51 // pred_fallthru
          _
        // Predicated region
        $region69: #{tpu_custom_call.1} parent=51 // pred_check
          %p382 = pneg %p138
        $region70: #{tpu_custom_call.1} parent=51 // pred_check_branch
          %384 = sbr.rel (%p382) target = $region72
        $region71: #{tpu_custom_call.1} parent=51 // pred_region
          %386 = dma.done [#allocation9], 32768
        $region72: #{tpu_custom_call.1} parent=51 // pred_fallthru
          _
        // Predicated region
        $region73: #{tpu_custom_call.1} parent=51 // pred_check
          %p387 = pneg %p180
        $region74: #{tpu_custom_call.1} parent=51 // pred_check_branch
          %389 = sbr.rel (%p387) target = $region76
        $region75: #{tpu_custom_call.1} parent=51 // pred_region
          %391 = dma.done [#allocation12], 64
        $region76: #{tpu_custom_call.1} parent=51 // pred_fallthru
          _
        %s392 = sand.u32 %s36, 1
        %s393 = scalar_lea.sflag [#allocation4], %s392
        %s394 = sand.u32 %s36, 1
        %s395 = smul.addr %s394, 4
        %s396 = scalar_lea.vmem [#allocation3], %s395
        %p397 = pneg %p49
        %p398 = pneg %p46
        %s399 = sand.u32 %s28, 1
        %s400 = scalar_lea.sflag [#allocation6], %s399
        %s401 = sand.u32 %s62, 1
        %s402 = smul.addr %s401, 160
        %s403 = scalar_lea.vmem [#allocation5], %s402
        %p404 = pneg %p75
        %p405 = pneg %p72
        %p406 = pneg %p96
        %p407 = pneg %p93
        %p408 = pneg %p117
        %p409 = pneg %p114
        %p410 = pneg %p138
        %p411 = pneg %p135
        %p412 = pneg %p159
        %p413 = pneg %p156
        %p414 = pneg %p180
        %p415 = pneg %p177
        %p416 = pneg %p201
        %p417 = pneg %p198
        %p418 = pneg %p227
        %p419 = pneg %p224
        %s420 = smul.u32 5, %s28
        %p421 = scmp.lt.s32.totalorder %s420, 9
        %s422 = scalar_select %p421, %s420, 9
        %s423 = smul.addr %s422, 8
        %s424 = scalar_lea.vmem %s8, %s423
        %s425 = smul.u32 5, %s28
        %p426 = scmp.lt.s32.totalorder %s425, 9
        %s427 = scalar_select %p426, %s425, 9
        %s428 = smul.addr %s427, 8
        %s429 = scalar_lea.vmem %s8, %s428
        %s430 = smul.u32 5, %s28
        %v432 = vld [vmem:[%s356] sm:$0xf]
        %v433 = vld [vmem:[#allocation7] sm:$0xff]
        %v434 = vld [vmem:[#allocation7 + $0x8] sm:$0xff]
        %v435 = vld [vmem:[#allocation7 + $0x10] sm:$0xff]
        %v436 = vld [vmem:[#allocation7 + $0x18] sm:$0xff]
        %v437 = vld [vmem:[#allocation7 + $0x20] sm:$0xff]
        %v438 = vld [vmem:[#allocation7 + $0x28] sm:$0xff]
        %v439 = vld [vmem:[#allocation7 + $0x30] sm:$0xff]
        %v440 = vld [vmem:[#allocation7 + $0x38] sm:$0xff]
        %v441 = vld [vmem:[#allocation7 + $0x40] sm:$0xff]
        %v442 = vld [vmem:[#allocation7 + $0x48] sm:$0xff]
        %v443 = vld [vmem:[#allocation7 + $0x50] sm:$0xff]
        %v444 = vld [vmem:[#allocation7 + $0x58] sm:$0xff]
        %v445 = vld [vmem:[#allocation7 + $0x60] sm:$0xff]
        %v446 = vld [vmem:[#allocation7 + $0x68] sm:$0xff]
        %v447 = vld [vmem:[#allocation7 + $0x70] sm:$0xff]
        %v448 = vld [vmem:[#allocation7 + $0x78] sm:$0xff]
        %v449 = vld [vmem:[#allocation7 + $0x80] sm:$0xff]
        %v450 = vld [vmem:[#allocation7 + $0x88] sm:$0xff]
        %v451 = vld [vmem:[#allocation7 + $0x90] sm:$0xff]
        %v452 = vld [vmem:[#allocation7 + $0x98] sm:$0xff]
        %v453 = vld [vmem:[#allocation7 + $0xa0] sm:$0xff]
        %v454 = vld [vmem:[#allocation7 + $0xa8] sm:$0xff]
        %v455 = vld [vmem:[#allocation7 + $0xb0] sm:$0xff]
        %v456 = vld [vmem:[#allocation7 + $0xb8] sm:$0xff]
        %v457 = vld [vmem:[#allocation7 + $0xc0] sm:$0xff]
        %v458 = vld [vmem:[#allocation7 + $0xc8] sm:$0xff]
        %v459 = vld [vmem:[#allocation7 + $0xd0] sm:$0xff]
        %v460 = vld [vmem:[#allocation7 + $0xd8] sm:$0xff]
        %v461 = vld [vmem:[#allocation7 + $0xe0] sm:$0xff]
        %v462 = vld [vmem:[#allocation7 + $0xe8] sm:$0xff]
        %v463 = vld [vmem:[#allocation7 + $0xf0] sm:$0xff]
        %v464 = vld [vmem:[#allocation7 + $0xf8] sm:$0xff]
        %v465 = vld [vmem:[#allocation7 + $0x100] sm:$0xff]
        %v466 = vld [vmem:[#allocation7 + $0x108] sm:$0xff]
        %v467 = vld [vmem:[#allocation7 + $0x110] sm:$0xff]
        %v468 = vld [vmem:[#allocation7 + $0x118] sm:$0xff]
        %v469 = vld [vmem:[#allocation7 + $0x120] sm:$0xff]
        %v470 = vld [vmem:[#allocation7 + $0x128] sm:$0xff]
        %v471 = vld [vmem:[#allocation7 + $0x130] sm:$0xff]
        %v472 = vld [vmem:[#allocation7 + $0x138] sm:$0xff]
        %v473 = vld [vmem:[#allocation8] sm:$0xff]
        %v475 = vperm.slane %v473, 0
        %v476 = vperm.slane %v473, 1
        %v477 = vperm.slane %v473, 2
        %v478 = vperm.slane %v473, 3
        %v479 = vperm.slane %v473, 4
        %v480 = vperm.slane %v473, 5
        %v481 = vperm.slane %v473, 6
        %v482 = vperm.slane %v473, 7
        %v531 = vunpack.c.l.b16 %v433
        %v532 = vunpack.c.h.b16 %v433
        %v533 = vunpack.c.l.b16 %v434
        %v534 = vunpack.c.h.b16 %v434
        %v535 = vunpack.c.l.b16 %v435
        %v536 = vunpack.c.h.b16 %v435
        %v537 = vunpack.c.l.b16 %v436
        %v538 = vunpack.c.h.b16 %v436
        %v539 = vunpack.c.l.b16 %v437
        %v540 = vunpack.c.h.b16 %v437
        %v541 = vunpack.c.l.b16 %v438
        %v542 = vunpack.c.h.b16 %v438
        %v543 = vunpack.c.l.b16 %v439
        %v544 = vunpack.c.h.b16 %v439
        %v545 = vunpack.c.l.b16 %v440
        %v546 = vunpack.c.h.b16 %v440
        %v547 = vunpack.c.l.b16 %v441
        %v548 = vunpack.c.h.b16 %v441
        %v549 = vunpack.c.l.b16 %v442
        %v550 = vunpack.c.h.b16 %v442
        %v551 = vunpack.c.l.b16 %v443
        %v552 = vunpack.c.h.b16 %v443
        %v553 = vunpack.c.l.b16 %v444
        %v554 = vunpack.c.h.b16 %v444
        %v555 = vunpack.c.l.b16 %v445
        %v556 = vunpack.c.h.b16 %v445
        %v557 = vunpack.c.l.b16 %v446
        %v558 = vunpack.c.h.b16 %v446
        %v559 = vunpack.c.l.b16 %v447
        %v560 = vunpack.c.h.b16 %v447
        %v561 = vunpack.c.l.b16 %v448
        %v562 = vunpack.c.h.b16 %v448
        %v563 = vunpack.c.l.b16 %v449
        %v564 = vunpack.c.h.b16 %v449
        %v565 = vunpack.c.l.b16 %v450
        %v566 = vunpack.c.h.b16 %v450
        %v567 = vunpack.c.l.b16 %v451
        %v568 = vunpack.c.h.b16 %v451
        %v569 = vunpack.c.l.b16 %v452
        %v570 = vunpack.c.h.b16 %v452
        %v571 = vunpack.c.l.b16 %v453
        %v572 = vunpack.c.h.b16 %v453
        %v573 = vunpack.c.l.b16 %v454
        %v574 = vunpack.c.h.b16 %v454
        %v575 = vunpack.c.l.b16 %v455
        %v576 = vunpack.c.h.b16 %v455
        %v577 = vunpack.c.l.b16 %v456
        %v578 = vunpack.c.h.b16 %v456
        %v579 = vunpack.c.l.b16 %v457
        %v580 = vunpack.c.h.b16 %v457
        %v581 = vunpack.c.l.b16 %v458
        %v582 = vunpack.c.h.b16 %v458
        %v583 = vunpack.c.l.b16 %v459
        %v584 = vunpack.c.h.b16 %v459
        %v585 = vunpack.c.l.b16 %v460
        %v586 = vunpack.c.h.b16 %v460
        %v587 = vunpack.c.l.b16 %v461
        %v588 = vunpack.c.h.b16 %v461
        %v589 = vunpack.c.l.b16 %v462
        %v590 = vunpack.c.h.b16 %v462
        %v591 = vunpack.c.l.b16 %v463
        %v592 = vunpack.c.h.b16 %v463
        %v593 = vunpack.c.l.b16 %v464
        %v594 = vunpack.c.h.b16 %v464
        %v595 = vunpack.c.l.b16 %v465
        %v596 = vunpack.c.h.b16 %v465
        %v597 = vunpack.c.l.b16 %v466
        %v598 = vunpack.c.h.b16 %v466
        %v599 = vunpack.c.l.b16 %v467
        %v600 = vunpack.c.h.b16 %v467
        %v601 = vunpack.c.l.b16 %v468
        %v602 = vunpack.c.h.b16 %v468
        %v603 = vunpack.c.l.b16 %v469
        %v604 = vunpack.c.h.b16 %v469
        %v605 = vunpack.c.l.b16 %v470
        %v606 = vunpack.c.h.b16 %v470
        %v607 = vunpack.c.l.b16 %v471
        %v608 = vunpack.c.h.b16 %v471
        %v609 = vunpack.c.l.b16 %v472
        %v610 = vunpack.c.h.b16 %v472
        %v611 = vpack.c.b16 %v539, %v531
        %v612 = vpack.c.b16 %v540, %v532
        %v613 = vpack.c.b16 %v541, %v533
        %v614 = vpack.c.b16 %v542, %v534
        %v615 = vpack.c.b16 %v543, %v535
        %v616 = vpack.c.b16 %v544, %v536
        %v617 = vpack.c.b16 %v545, %v537
        %v618 = vpack.c.b16 %v546, %v538
        %v619 = vpack.c.b16 %v555, %v547
        %v620 = vpack.c.b16 %v556, %v548
        %v621 = vpack.c.b16 %v557, %v549
        %v622 = vpack.c.b16 %v558, %v550
        %v623 = vpack.c.b16 %v559, %v551
        %v624 = vpack.c.b16 %v560, %v552
        %v625 = vpack.c.b16 %v561, %v553
        %v626 = vpack.c.b16 %v562, %v554
        %v627 = vpack.c.b16 %v571, %v563
        %v628 = vpack.c.b16 %v572, %v564
        %v629 = vpack.c.b16 %v573, %v565
        %v630 = vpack.c.b16 %v574, %v566
        %v631 = vpack.c.b16 %v575, %v567
        %v632 = vpack.c.b16 %v576, %v568
        %v633 = vpack.c.b16 %v577, %v569
        %v634 = vpack.c.b16 %v578, %v570
        %v635 = vpack.c.b16 %v587, %v579
        %v636 = vpack.c.b16 %v588, %v580
        %v637 = vpack.c.b16 %v589, %v581
        %v638 = vpack.c.b16 %v590, %v582
        %v639 = vpack.c.b16 %v591, %v583
        %v640 = vpack.c.b16 %v592, %v584
        %v641 = vpack.c.b16 %v593, %v585
        %v642 = vpack.c.b16 %v594, %v586
        %v643 = vpack.c.b16 %v603, %v595
        %v644 = vpack.c.b16 %v604, %v596
        %v645 = vpack.c.b16 %v605, %v597
        %v646 = vpack.c.b16 %v606, %v598
        %v647 = vpack.c.b16 %v607, %v599
        %v648 = vpack.c.b16 %v608, %v600
        %v649 = vpack.c.b16 %v609, %v601
        %v650 = vpack.c.b16 %v610, %v602
        %vm691 = vcmask 654336
        %v693 = vsel %vm691, %v432, 0
        %695 = vmatpush.bf16.msra.mxu0 0
        %696 = vmatpush.bf16.msra.mxu0 0
        %697 = vmatpush.bf16.msra.mxu0 0
        %698 = vmatpush.bf16.msra.mxu0 %v643
        %699 = vmatpush.bf16.msra.mxu0 %v635
        %700 = vmatpush.bf16.msra.mxu0 %v627
        %701 = vmatpush.bf16.msra.mxu0 %v619
        %702 = vmatpush.bf16.msra.mxu0 %v611
        %703 = vmatmul.bf16.gmra.mxu0 %v693
        %v704 = vpop.f32.mrf.mxu0
        %v705 = vadd.f32 %v475, %v704
        %v706 = vpop.f32.mrf.mxu0
        %707 = vdwg.mxu0
        %708 = vmatpush.bf16.msra.mxu0 0
        %709 = vmatpush.bf16.msra.mxu0 0
        %710 = vmatpush.bf16.msra.mxu0 0
        %711 = vmatpush.bf16.msra.mxu0 %v644
        %712 = vmatpush.bf16.msra.mxu0 %v636
        %713 = vmatpush.bf16.msra.mxu0 %v628
        %714 = vmatpush.bf16.msra.mxu0 %v620
        %715 = vmatpush.bf16.msra.mxu0 %v612
        %716 = vmatmul.bf16.gmra.mxu0 %v693
        %v717 = vpop.f32.mrf.mxu0
        %v718 = vadd.f32 %v476, %v717
        %v719 = vpop.f32.mrf.mxu0
        %720 = vdwg.mxu0
        %721 = vmatpush.bf16.msra.mxu0 0
        %722 = vmatpush.bf16.msra.mxu0 0
        %723 = vmatpush.bf16.msra.mxu0 0
        %724 = vmatpush.bf16.msra.mxu0 %v645
        %725 = vmatpush.bf16.msra.mxu0 %v637
        %726 = vmatpush.bf16.msra.mxu0 %v629
        %727 = vmatpush.bf16.msra.mxu0 %v621
        %728 = vmatpush.bf16.msra.mxu0 %v613
        %729 = vmatmul.bf16.gmra.mxu0 %v693
        %v730 = vpop.f32.mrf.mxu0
        %v731 = vadd.f32 %v477, %v730
        %v732 = vpop.f32.mrf.mxu0
        %733 = vdwg.mxu0
        %734 = vmatpush.bf16.msra.mxu0 0
        %735 = vmatpush.bf16.msra.mxu0 0
        %736 = vmatpush.bf16.msra.mxu0 0
        %737 = vmatpush.bf16.msra.mxu0 %v646
        %738 = vmatpush.bf16.msra.mxu0 %v638
        %739 = vmatpush.bf16.msra.mxu0 %v630
        %740 = vmatpush.bf16.msra.mxu0 %v622
        %741 = vmatpush.bf16.msra.mxu0 %v614
        %742 = vmatmul.bf16.gmra.mxu0 %v693
        %v743 = vpop.f32.mrf.mxu0
        %v744 = vadd.f32 %v478, %v743
        %v745 = vpop.f32.mrf.mxu0
        %746 = vdwg.mxu0
        %747 = vmatpush.bf16.msra.mxu0 0
        %748 = vmatpush.bf16.msra.mxu0 0
        %749 = vmatpush.bf16.msra.mxu0 0
        %750 = vmatpush.bf16.msra.mxu0 %v647
        %751 = vmatpush.bf16.msra.mxu0 %v639
        %752 = vmatpush.bf16.msra.mxu0 %v631
        %753 = vmatpush.bf16.msra.mxu0 %v623
        %754 = vmatpush.bf16.msra.mxu0 %v615
        %755 = vmatmul.bf16.gmra.mxu0 %v693
        %v756 = vpop.f32.mrf.mxu0
        %v757 = vadd.f32 %v479, %v756
        %v758 = vpop.f32.mrf.mxu0
        %759 = vdwg.mxu0
        %760 = vmatpush.bf16.msra.mxu0 0
        %761 = vmatpush.bf16.msra.mxu0 0
        %762 = vmatpush.bf16.msra.mxu0 0
        %763 = vmatpush.bf16.msra.mxu0 %v648
        %764 = vmatpush.bf16.msra.mxu0 %v640
        %765 = vmatpush.bf16.msra.mxu0 %v632
        %766 = vmatpush.bf16.msra.mxu0 %v624
        %767 = vmatpush.bf16.msra.mxu0 %v616
        %768 = vmatmul.bf16.gmra.mxu0 %v693
        %v769 = vpop.f32.mrf.mxu0
        %v770 = vadd.f32 %v480, %v769
        %v771 = vpop.f32.mrf.mxu0
        %772 = vdwg.mxu0
        %773 = vmatpush.bf16.msra.mxu0 0
        %774 = vmatpush.bf16.msra.mxu0 0
        %775 = vmatpush.bf16.msra.mxu0 0
        %776 = vmatpush.bf16.msra.mxu0 %v649
        %777 = vmatpush.bf16.msra.mxu0 %v641
        %778 = vmatpush.bf16.msra.mxu0 %v633
        %779 = vmatpush.bf16.msra.mxu0 %v625
        %780 = vmatpush.bf16.msra.mxu0 %v617
        %781 = vmatmul.bf16.gmra.mxu0 %v693
        %v782 = vpop.f32.mrf.mxu0
        %v783 = vadd.f32 %v481, %v782
        %v784 = vpop.f32.mrf.mxu0
        %785 = vdwg.mxu0
        %786 = vmatpush.bf16.msra.mxu0 0
        %787 = vmatpush.bf16.msra.mxu0 0
        %788 = vmatpush.bf16.msra.mxu0 0
        %789 = vmatpush.bf16.msra.mxu0 %v650
        %790 = vmatpush.bf16.msra.mxu0 %v642
        %791 = vmatpush.bf16.msra.mxu0 %v634
        %792 = vmatpush.bf16.msra.mxu0 %v626
        %793 = vmatpush.bf16.msra.mxu0 %v618
        %794 = vmatmul.bf16.gmra.mxu0 %v693
        %v795 = vpop.f32.mrf.mxu0
        %v796 = vadd.f32 %v482, %v795
        %v797 = vpop.f32.mrf.mxu0
        %798 = vdwg.mxu0
        %v799 = vmax.f32 %v705, 0.0
        %v800 = vmax.f32 %v718, 0.0
        %v801 = vmax.f32 %v731, 0.0
        %v802 = vmax.f32 %v744, 0.0
        %v803 = vmax.f32 %v757, 0.0
        %v804 = vmax.f32 %v770, 0.0
        %v805 = vmax.f32 %v783, 0.0
        %v806 = vmax.f32 %v796, 0.0
        %v807 = vld [vmem:[%s366] sm:$0xff]
        %v808 = vld [vmem:[%s366 + $0x8] sm:$0xff]
        %v809 = vld [vmem:[%s366 + $0x10] sm:$0xff]
        %v810 = vld [vmem:[%s366 + $0x18] sm:$0xff]
        %v811 = vld [vmem:[%s366 + $0x20] sm:$0xff]
        %v812 = vld [vmem:[%s366 + $0x28] sm:$0xff]
        %v813 = vld [vmem:[%s366 + $0x30] sm:$0xff]
        %v814 = vld [vmem:[%s366 + $0x38] sm:$0xff]
        %v815 = vld [vmem:[%s366 + $0x40] sm:$0xff]
        %v816 = vld [vmem:[%s366 + $0x48] sm:$0xff]
        %v817 = vld [vmem:[%s366 + $0x50] sm:$0xff]
        %v818 = vld [vmem:[%s366 + $0x58] sm:$0xff]
        %v819 = vld [vmem:[%s366 + $0x60] sm:$0xff]
        %v820 = vld [vmem:[%s366 + $0x68] sm:$0xff]
        %v821 = vld [vmem:[%s366 + $0x70] sm:$0xff]
        %v822 = vld [vmem:[%s366 + $0x78] sm:$0xff]
        %v823 = vld [vmem:[%s366 + $0x80] sm:$0xff]
        %v824 = vld [vmem:[%s366 + $0x88] sm:$0xff]
        %v825 = vld [vmem:[%s366 + $0x90] sm:$0xff]
        %v826 = vld [vmem:[%s366 + $0x98] sm:$0xff]
        %v827 = vpack.c.bf16 %v800, %v799
        %v828 = vpack.c.bf16 %v802, %v801
        %v829 = vpack.c.bf16 %v804, %v803
        %v830 = vpack.c.bf16 %v806, %v805
        %v831 = vunpack.c.l.bf16 %v827
        %v832 = vunpack.c.h.bf16 %v827
        %v833 = vunpack.c.l.bf16 %v828
        %v834 = vunpack.c.h.bf16 %v828
        %v835 = vunpack.c.l.bf16 %v829
        %v836 = vunpack.c.h.bf16 %v829
        %v837 = vunpack.c.l.bf16 %v830
        %v838 = vunpack.c.h.bf16 %v830
        %v839 = vunpack.c.l.bf16 %v807
        %v840 = vunpack.c.h.bf16 %v807
        %v841 = vunpack.c.l.bf16 %v808
        %v842 = vunpack.c.h.bf16 %v808
        %v843 = vunpack.c.l.bf16 %v809
        %v844 = vunpack.c.h.bf16 %v809
        %v845 = vunpack.c.l.bf16 %v810
        %v846 = vunpack.c.h.bf16 %v810
        %v847 = vunpack.c.l.bf16 %v811
        %v848 = vunpack.c.h.bf16 %v811
        %v849 = vunpack.c.l.bf16 %v812
        %v850 = vunpack.c.h.bf16 %v812
        %v851 = vunpack.c.l.bf16 %v813
        %v852 = vunpack.c.h.bf16 %v813
        %v853 = vunpack.c.l.bf16 %v814
        %v854 = vunpack.c.h.bf16 %v814
        %v855 = vunpack.c.l.bf16 %v815
        %v856 = vunpack.c.h.bf16 %v815
        %v857 = vunpack.c.l.bf16 %v816
        %v858 = vunpack.c.h.bf16 %v816
        %v859 = vunpack.c.l.bf16 %v817
        %v860 = vunpack.c.h.bf16 %v817
        %v861 = vunpack.c.l.bf16 %v818
        %v862 = vunpack.c.h.bf16 %v818
        %v863 = vunpack.c.l.bf16 %v819
        %v864 = vunpack.c.h.bf16 %v819
        %v865 = vunpack.c.l.bf16 %v820
        %v866 = vunpack.c.h.bf16 %v820
        %v867 = vunpack.c.l.bf16 %v821
        %v868 = vunpack.c.h.bf16 %v821
        %v869 = vunpack.c.l.bf16 %v822
        %v870 = vunpack.c.h.bf16 %v822
        %v871 = vunpack.c.l.bf16 %v823
        %v872 = vunpack.c.h.bf16 %v823
        %v873 = vunpack.c.l.bf16 %v824
        %v874 = vunpack.c.h.bf16 %v824
        %v875 = vunpack.c.l.bf16 %v825
        %v876 = vunpack.c.h.bf16 %v825
        %v877 = vunpack.c.l.bf16 %v826
        %v878 = vunpack.c.h.bf16 %v826
        %v879 = vmul.f32 %v831, %v839
        %v880 = vmul.f32 %v832, %v840
        %v881 = vmul.f32 %v833, %v841
        %v882 = vmul.f32 %v834, %v842
        %v883 = vmul.f32 %v835, %v843
        %v884 = vmul.f32 %v836, %v844
        %v885 = vmul.f32 %v837, %v845
        %v886 = vmul.f32 %v838, %v846
        %v887 = vmul.f32 %v831, %v847
        %v888 = vmul.f32 %v832, %v848
        %v889 = vmul.f32 %v833, %v849
        %v890 = vmul.f32 %v834, %v850
        %v891 = vmul.f32 %v835, %v851
        %v892 = vmul.f32 %v836, %v852
        %v893 = vmul.f32 %v837, %v853
        %v894 = vmul.f32 %v838, %v854
        %v895 = vmul.f32 %v831, %v855
        %v896 = vmul.f32 %v832, %v856
        %v897 = vmul.f32 %v833, %v857
        %v898 = vmul.f32 %v834, %v858
        %v899 = vmul.f32 %v835, %v859
        %v900 = vmul.f32 %v836, %v860
        %v901 = vmul.f32 %v837, %v861
        %v902 = vmul.f32 %v838, %v862
        %v903 = vmul.f32 %v831, %v863
        %v904 = vmul.f32 %v832, %v864
        %v905 = vmul.f32 %v833, %v865
        %v906 = vmul.f32 %v834, %v866
        %v907 = vmul.f32 %v835, %v867
        %v908 = vmul.f32 %v836, %v868
        %v909 = vmul.f32 %v837, %v869
        %v910 = vmul.f32 %v838, %v870
        %v911 = vmul.f32 %v831, %v871
        %v912 = vmul.f32 %v832, %v872
        %v913 = vmul.f32 %v833, %v873
        %v914 = vmul.f32 %v834, %v874
        %v915 = vmul.f32 %v835, %v875
        %v916 = vmul.f32 %v836, %v876
        %v917 = vmul.f32 %v837, %v877
        %v918 = vmul.f32 %v838, %v878
        %v919 = vpack.c.bf16 %v880, %v879
        %v920 = vpack.c.bf16 %v882, %v881
        %v921 = vpack.c.bf16 %v884, %v883
        %v922 = vpack.c.bf16 %v886, %v885
        %v923 = vpack.c.bf16 %v888, %v887
        %v924 = vpack.c.bf16 %v890, %v889
        %v925 = vpack.c.bf16 %v892, %v891
        %v926 = vpack.c.bf16 %v894, %v893
        %v927 = vpack.c.bf16 %v896, %v895
        %v928 = vpack.c.bf16 %v898, %v897
        %v929 = vpack.c.bf16 %v900, %v899
        %v930 = vpack.c.bf16 %v902, %v901
        %v931 = vpack.c.bf16 %v904, %v903
        %v932 = vpack.c.bf16 %v906, %v905
        %v933 = vpack.c.bf16 %v908, %v907
        %v934 = vpack.c.bf16 %v910, %v909
        %v935 = vpack.c.bf16 %v912, %v911
        %v936 = vpack.c.bf16 %v914, %v913
        %v937 = vpack.c.bf16 %v916, %v915
        %v938 = vpack.c.bf16 %v918, %v917
        %v939 = vld [vmem:[#allocation10] sm:$0xff]
        %v940 = vld [vmem:[#allocation10 + $0x8] sm:$0xff]
        %v941 = vld [vmem:[#allocation10 + $0x10] sm:$0xff]
        %v942 = vld [vmem:[#allocation10 + $0x18] sm:$0xff]
        %v943 = vld [vmem:[#allocation10 + $0x20] sm:$0xff]
        %v944 = vld [vmem:[#allocation10 + $0x28] sm:$0xff]
        %v945 = vld [vmem:[#allocation10 + $0x30] sm:$0xff]
        %v946 = vld [vmem:[#allocation10 + $0x38] sm:$0xff]
        %v947 = vld [vmem:[#allocation10 + $0x40] sm:$0xff]
        %v948 = vld [vmem:[#allocation10 + $0x48] sm:$0xff]
        %v949 = vld [vmem:[#allocation10 + $0x50] sm:$0xff]
        %v950 = vld [vmem:[#allocation10 + $0x58] sm:$0xff]
        %v951 = vld [vmem:[#allocation10 + $0x60] sm:$0xff]
        %v952 = vld [vmem:[#allocation10 + $0x68] sm:$0xff]
        %v953 = vld [vmem:[#allocation10 + $0x70] sm:$0xff]
        %v954 = vld [vmem:[#allocation10 + $0x78] sm:$0xff]
        %v955 = vld [vmem:[#allocation10 + $0x80] sm:$0xff]
        %v956 = vld [vmem:[#allocation10 + $0x88] sm:$0xff]
        %v957 = vld [vmem:[#allocation10 + $0x90] sm:$0xff]
        %v958 = vld [vmem:[#allocation10 + $0x98] sm:$0xff]
        %v959 = vld [vmem:[#allocation10 + $0xa0] sm:$0xff]
        %v960 = vld [vmem:[#allocation10 + $0xa8] sm:$0xff]
        %v961 = vld [vmem:[#allocation10 + $0xb0] sm:$0xff]
        %v962 = vld [vmem:[#allocation10 + $0xb8] sm:$0xff]
        %v963 = vld [vmem:[#allocation10 + $0xc0] sm:$0xff]
        %v964 = vld [vmem:[#allocation10 + $0xc8] sm:$0xff]
        %v965 = vld [vmem:[#allocation10 + $0xd0] sm:$0xff]
        %v966 = vld [vmem:[#allocation10 + $0xd8] sm:$0xff]
        %v967 = vld [vmem:[#allocation10 + $0xe0] sm:$0xff]
        %v968 = vld [vmem:[#allocation10 + $0xe8] sm:$0xff]
        %v969 = vld [vmem:[#allocation10 + $0xf0] sm:$0xff]
        %v970 = vld [vmem:[#allocation10 + $0xf8] sm:$0xff]
        %v971 = vld [vmem:[#allocation10 + $0x100] sm:$0xff]
        %v972 = vld [vmem:[#allocation10 + $0x108] sm:$0xff]
        %v973 = vld [vmem:[#allocation10 + $0x110] sm:$0xff]
        %v974 = vld [vmem:[#allocation10 + $0x118] sm:$0xff]
        %v975 = vld [vmem:[#allocation10 + $0x120] sm:$0xff]
        %v976 = vld [vmem:[#allocation10 + $0x128] sm:$0xff]
        %v977 = vld [vmem:[#allocation10 + $0x130] sm:$0xff]
        %v978 = vld [vmem:[#allocation10 + $0x138] sm:$0xff]
        %v979 = vld [vmem:[#allocation10 + $0x140] sm:$0xff]
        %v980 = vld [vmem:[#allocation10 + $0x148] sm:$0xff]
        %v981 = vld [vmem:[#allocation10 + $0x150] sm:$0xff]
        %v982 = vld [vmem:[#allocation10 + $0x158] sm:$0xff]
        %v983 = vld [vmem:[#allocation10 + $0x160] sm:$0xff]
        %v984 = vld [vmem:[#allocation10 + $0x168] sm:$0xff]
        %v985 = vld [vmem:[#allocation10 + $0x170] sm:$0xff]
        %v986 = vld [vmem:[#allocation10 + $0x178] sm:$0xff]
        %v987 = vld [vmem:[#allocation10 + $0x180] sm:$0xff]
        %v988 = vld [vmem:[#allocation10 + $0x188] sm:$0xff]
        %v989 = vld [vmem:[#allocation10 + $0x190] sm:$0xff]
        %v990 = vld [vmem:[#allocation10 + $0x198] sm:$0xff]
        %v991 = vld [vmem:[#allocation10 + $0x1a0] sm:$0xff]
        %v992 = vld [vmem:[#allocation10 + $0x1a8] sm:$0xff]
        %v993 = vld [vmem:[#allocation10 + $0x1b0] sm:$0xff]
        %v994 = vld [vmem:[#allocation10 + $0x1b8] sm:$0xff]
        %v995 = vld [vmem:[#allocation10 + $0x1c0] sm:$0xff]
        %v996 = vld [vmem:[#allocation10 + $0x1c8] sm:$0xff]
        %v997 = vld [vmem:[#allocation10 + $0x1d0] sm:$0xff]
        %v998 = vld [vmem:[#allocation10 + $0x1d8] sm:$0xff]
        %v999 = vld [vmem:[#allocation10 + $0x1e0] sm:$0xff]
        %v1000 = vld [vmem:[#allocation10 + $0x1e8] sm:$0xff]
        %v1001 = vld [vmem:[#allocation10 + $0x1f0] sm:$0xff]
        %v1002 = vld [vmem:[#allocation10 + $0x1f8] sm:$0xff]
        %v1003 = vld [vmem:[#allocation10 + $0x200] sm:$0xff]
        %v1004 = vld [vmem:[#allocation10 + $0x208] sm:$0xff]
        %v1005 = vld [vmem:[#allocation10 + $0x210] sm:$0xff]
        %v1006 = vld [vmem:[#allocation10 + $0x218] sm:$0xff]
        %v1007 = vld [vmem:[#allocation10 + $0x220] sm:$0xff]
        %v1008 = vld [vmem:[#allocation10 + $0x228] sm:$0xff]
        %v1009 = vld [vmem:[#allocation10 + $0x230] sm:$0xff]
        %v1010 = vld [vmem:[#allocation10 + $0x238] sm:$0xff]
        %v1011 = vld [vmem:[#allocation10 + $0x240] sm:$0xff]
        %v1012 = vld [vmem:[#allocation10 + $0x248] sm:$0xff]
        %v1013 = vld [vmem:[#allocation10 + $0x250] sm:$0xff]
        %v1014 = vld [vmem:[#allocation10 + $0x258] sm:$0xff]
        %v1015 = vld [vmem:[#allocation10 + $0x260] sm:$0xff]
        %v1016 = vld [vmem:[#allocation10 + $0x268] sm:$0xff]
        %v1017 = vld [vmem:[#allocation10 + $0x270] sm:$0xff]
        %v1018 = vld [vmem:[#allocation10 + $0x278] sm:$0xff]
        %v1019 = vld [vmem:[#allocation10 + $0x280] sm:$0xff]
        %v1020 = vld [vmem:[#allocation10 + $0x288] sm:$0xff]
        %v1021 = vld [vmem:[#allocation10 + $0x290] sm:$0xff]
        %v1022 = vld [vmem:[#allocation10 + $0x298] sm:$0xff]
        %v1023 = vld [vmem:[#allocation10 + $0x2a0] sm:$0xff]
        %v1024 = vld [vmem:[#allocation10 + $0x2a8] sm:$0xff]
        %v1025 = vld [vmem:[#allocation10 + $0x2b0] sm:$0xff]
        %v1026 = vld [vmem:[#allocation10 + $0x2b8] sm:$0xff]
        %v1027 = vld [vmem:[#allocation10 + $0x2c0] sm:$0xff]
        %v1028 = vld [vmem:[#allocation10 + $0x2c8] sm:$0xff]
        %v1029 = vld [vmem:[#allocation10 + $0x2d0] sm:$0xff]
        %v1030 = vld [vmem:[#allocation10 + $0x2d8] sm:$0xff]
        %v1031 = vld [vmem:[#allocation10 + $0x2e0] sm:$0xff]
        %v1032 = vld [vmem:[#allocation10 + $0x2e8] sm:$0xff]
        %v1033 = vld [vmem:[#allocation10 + $0x2f0] sm:$0xff]
        %v1034 = vld [vmem:[#allocation10 + $0x2f8] sm:$0xff]
        %v1035 = vld [vmem:[#allocation10 + $0x300] sm:$0xff]
        %v1036 = vld [vmem:[#allocation10 + $0x308] sm:$0xff]
        %v1037 = vld [vmem:[#allocation10 + $0x310] sm:$0xff]
        %v1038 = vld [vmem:[#allocation10 + $0x318] sm:$0xff]
        %v1039 = vld [vmem:[#allocation10 + $0x320] sm:$0xff]
        %v1040 = vld [vmem:[#allocation10 + $0x328] sm:$0xff]
        %v1041 = vld [vmem:[#allocation10 + $0x330] sm:$0xff]
        %v1042 = vld [vmem:[#allocation10 + $0x338] sm:$0xff]
        %v1043 = vld [vmem:[#allocation10 + $0x340] sm:$0xff]
        %v1044 = vld [vmem:[#allocation10 + $0x348] sm:$0xff]
        %v1045 = vld [vmem:[#allocation10 + $0x350] sm:$0xff]
        %v1046 = vld [vmem:[#allocation10 + $0x358] sm:$0xff]
        %v1047 = vld [vmem:[#allocation10 + $0x360] sm:$0xff]
        %v1048 = vld [vmem:[#allocation10 + $0x368] sm:$0xff]
        %v1049 = vld [vmem:[#allocation10 + $0x370] sm:$0xff]
        %v1050 = vld [vmem:[#allocation10 + $0x378] sm:$0xff]
        %v1051 = vld [vmem:[#allocation10 + $0x380] sm:$0xff]
        %v1052 = vld [vmem:[#allocation10 + $0x388] sm:$0xff]
        %v1053 = vld [vmem:[#allocation10 + $0x390] sm:$0xff]
        %v1054 = vld [vmem:[#allocation10 + $0x398] sm:$0xff]
        %v1055 = vld [vmem:[#allocation10 + $0x3a0] sm:$0xff]
        %v1056 = vld [vmem:[#allocation10 + $0x3a8] sm:$0xff]
        %v1057 = vld [vmem:[#allocation10 + $0x3b0] sm:$0xff]
        %v1058 = vld [vmem:[#allocation10 + $0x3b8] sm:$0xff]
        %v1059 = vld [vmem:[#allocation10 + $0x3c0] sm:$0xff]
        %v1060 = vld [vmem:[#allocation10 + $0x3c8] sm:$0xff]
        %v1061 = vld [vmem:[#allocation10 + $0x3d0] sm:$0xff]
        %v1062 = vld [vmem:[#allocation10 + $0x3d8] sm:$0xff]
        %v1063 = vld [vmem:[#allocation10 + $0x3e0] sm:$0xff]
        %v1064 = vld [vmem:[#allocation10 + $0x3e8] sm:$0xff]
        %v1065 = vld [vmem:[#allocation10 + $0x3f0] sm:$0xff]
        %v1066 = vld [vmem:[#allocation10 + $0x3f8] sm:$0xff]
        %v1067 = vld [vmem:[#allocation10 + $0x400] sm:$0xff]
        %v1068 = vld [vmem:[#allocation10 + $0x408] sm:$0xff]
        %v1069 = vld [vmem:[#allocation10 + $0x410] sm:$0xff]
        %v1070 = vld [vmem:[#allocation10 + $0x418] sm:$0xff]
        %v1071 = vld [vmem:[#allocation10 + $0x420] sm:$0xff]
        %v1072 = vld [vmem:[#allocation10 + $0x428] sm:$0xff]
        %v1073 = vld [vmem:[#allocation10 + $0x430] sm:$0xff]
        %v1074 = vld [vmem:[#allocation10 + $0x438] sm:$0xff]
        %v1075 = vld [vmem:[#allocation10 + $0x440] sm:$0xff]
        %v1076 = vld [vmem:[#allocation10 + $0x448] sm:$0xff]
        %v1077 = vld [vmem:[#allocation10 + $0x450] sm:$0xff]
        %v1078 = vld [vmem:[#allocation10 + $0x458] sm:$0xff]
        %v1079 = vld [vmem:[#allocation10 + $0x460] sm:$0xff]
        %v1080 = vld [vmem:[#allocation10 + $0x468] sm:$0xff]
        %v1081 = vld [vmem:[#allocation10 + $0x470] sm:$0xff]
        %v1082 = vld [vmem:[#allocation10 + $0x478] sm:$0xff]
        %v1083 = vld [vmem:[#allocation10 + $0x480] sm:$0xff]
        %v1084 = vld [vmem:[#allocation10 + $0x488] sm:$0xff]
        %v1085 = vld [vmem:[#allocation10 + $0x490] sm:$0xff]
        %v1086 = vld [vmem:[#allocation10 + $0x498] sm:$0xff]
        %v1087 = vld [vmem:[#allocation10 + $0x4a0] sm:$0xff]
        %v1088 = vld [vmem:[#allocation10 + $0x4a8] sm:$0xff]
        %v1089 = vld [vmem:[#allocation10 + $0x4b0] sm:$0xff]
        %v1090 = vld [vmem:[#allocation10 + $0x4b8] sm:$0xff]
        %v1091 = vld [vmem:[#allocation10 + $0x4c0] sm:$0xff]
        %v1092 = vld [vmem:[#allocation10 + $0x4c8] sm:$0xff]
        %v1093 = vld [vmem:[#allocation10 + $0x4d0] sm:$0xff]
        %v1094 = vld [vmem:[#allocation10 + $0x4d8] sm:$0xff]
        %v1095 = vld [vmem:[#allocation10 + $0x4e0] sm:$0xff]
        %v1096 = vld [vmem:[#allocation10 + $0x4e8] sm:$0xff]
        %v1097 = vld [vmem:[#allocation10 + $0x4f0] sm:$0xff]
        %v1098 = vld [vmem:[#allocation10 + $0x4f8] sm:$0xff]
        %v1099 = vld [vmem:[#allocation10 + $0x500] sm:$0xff]
        %v1100 = vld [vmem:[#allocation10 + $0x508] sm:$0xff]
        %v1101 = vld [vmem:[#allocation10 + $0x510] sm:$0xff]
        %v1102 = vld [vmem:[#allocation10 + $0x518] sm:$0xff]
        %v1103 = vld [vmem:[#allocation10 + $0x520] sm:$0xff]
        %v1104 = vld [vmem:[#allocation10 + $0x528] sm:$0xff]
        %v1105 = vld [vmem:[#allocation10 + $0x530] sm:$0xff]
        %v1106 = vld [vmem:[#allocation10 + $0x538] sm:$0xff]
        %v1107 = vld [vmem:[#allocation10 + $0x540] sm:$0xff]
        %v1108 = vld [vmem:[#allocation10 + $0x548] sm:$0xff]
        %v1109 = vld [vmem:[#allocation10 + $0x550] sm:$0xff]
        %v1110 = vld [vmem:[#allocation10 + $0x558] sm:$0xff]
        %v1111 = vld [vmem:[#allocation10 + $0x560] sm:$0xff]
        %v1112 = vld [vmem:[#allocation10 + $0x568] sm:$0xff]
        %v1113 = vld [vmem:[#allocation10 + $0x570] sm:$0xff]
        %v1114 = vld [vmem:[#allocation10 + $0x578] sm:$0xff]
        %v1115 = vld [vmem:[#allocation10 + $0x580] sm:$0xff]
        %v1116 = vld [vmem:[#allocation10 + $0x588] sm:$0xff]
        %v1117 = vld [vmem:[#allocation10 + $0x590] sm:$0xff]
        %v1118 = vld [vmem:[#allocation10 + $0x598] sm:$0xff]
        %v1119 = vld [vmem:[#allocation10 + $0x5a0] sm:$0xff]
        %v1120 = vld [vmem:[#allocation10 + $0x5a8] sm:$0xff]
        %v1121 = vld [vmem:[#allocation10 + $0x5b0] sm:$0xff]
        %v1122 = vld [vmem:[#allocation10 + $0x5b8] sm:$0xff]
        %v1123 = vld [vmem:[#allocation10 + $0x5c0] sm:$0xff]
        %v1124 = vld [vmem:[#allocation10 + $0x5c8] sm:$0xff]
        %v1125 = vld [vmem:[#allocation10 + $0x5d0] sm:$0xff]
        %v1126 = vld [vmem:[#allocation10 + $0x5d8] sm:$0xff]
        %v1127 = vld [vmem:[#allocation10 + $0x5e0] sm:$0xff]
        %v1128 = vld [vmem:[#allocation10 + $0x5e8] sm:$0xff]
        %v1129 = vld [vmem:[#allocation10 + $0x5f0] sm:$0xff]
        %v1130 = vld [vmem:[#allocation10 + $0x5f8] sm:$0xff]
        %v1131 = vld [vmem:[#allocation10 + $0x600] sm:$0xff]
        %v1132 = vld [vmem:[#allocation10 + $0x608] sm:$0xff]
        %v1133 = vld [vmem:[#allocation10 + $0x610] sm:$0xff]
        %v1134 = vld [vmem:[#allocation10 + $0x618] sm:$0xff]
        %v1135 = vld [vmem:[#allocation10 + $0x620] sm:$0xff]
        %v1136 = vld [vmem:[#allocation10 + $0x628] sm:$0xff]
        %v1137 = vld [vmem:[#allocation10 + $0x630] sm:$0xff]
        %v1138 = vld [vmem:[#allocation10 + $0x638] sm:$0xff]
        %v1139 = vld [vmem:[#allocation10 + $0x640] sm:$0xff]
        %v1140 = vld [vmem:[#allocation10 + $0x648] sm:$0xff]
        %v1141 = vld [vmem:[#allocation10 + $0x650] sm:$0xff]
        %v1142 = vld [vmem:[#allocation10 + $0x658] sm:$0xff]
        %v1143 = vld [vmem:[#allocation10 + $0x660] sm:$0xff]
        %v1144 = vld [vmem:[#allocation10 + $0x668] sm:$0xff]
        %v1145 = vld [vmem:[#allocation10 + $0x670] sm:$0xff]
        %v1146 = vld [vmem:[#allocation10 + $0x678] sm:$0xff]
        %v1147 = vld [vmem:[#allocation10 + $0x680] sm:$0xff]
        %v1148 = vld [vmem:[#allocation10 + $0x688] sm:$0xff]
        %v1149 = vld [vmem:[#allocation10 + $0x690] sm:$0xff]
        %v1150 = vld [vmem:[#allocation10 + $0x698] sm:$0xff]
        %v1151 = vld [vmem:[#allocation10 + $0x6a0] sm:$0xff]
        %v1152 = vld [vmem:[#allocation10 + $0x6a8] sm:$0xff]
        %v1153 = vld [vmem:[#allocation10 + $0x6b0] sm:$0xff]
        %v1154 = vld [vmem:[#allocation10 + $0x6b8] sm:$0xff]
        %v1155 = vld [vmem:[#allocation10 + $0x6c0] sm:$0xff]
        %v1156 = vld [vmem:[#allocation10 + $0x6c8] sm:$0xff]
        %v1157 = vld [vmem:[#allocation10 + $0x6d0] sm:$0xff]
        %v1158 = vld [vmem:[#allocation10 + $0x6d8] sm:$0xff]
        %v1159 = vld [vmem:[#allocation10 + $0x6e0] sm:$0xff]
        %v1160 = vld [vmem:[#allocation10 + $0x6e8] sm:$0xff]
        %v1161 = vld [vmem:[#allocation10 + $0x6f0] sm:$0xff]
        %v1162 = vld [vmem:[#allocation10 + $0x6f8] sm:$0xff]
        %v1163 = vld [vmem:[#allocation10 + $0x700] sm:$0xff]
        %v1164 = vld [vmem:[#allocation10 + $0x708] sm:$0xff]
        %v1165 = vld [vmem:[#allocation10 + $0x710] sm:$0xff]
        %v1166 = vld [vmem:[#allocation10 + $0x718] sm:$0xff]
        %v1167 = vld [vmem:[#allocation10 + $0x720] sm:$0xff]
        %v1168 = vld [vmem:[#allocation10 + $0x728] sm:$0xff]
        %v1169 = vld [vmem:[#allocation10 + $0x730] sm:$0xff]
        %v1170 = vld [vmem:[#allocation10 + $0x738] sm:$0xff]
        %v1171 = vld [vmem:[#allocation10 + $0x740] sm:$0xff]
        %v1172 = vld [vmem:[#allocation10 + $0x748] sm:$0xff]
        %v1173 = vld [vmem:[#allocation10 + $0x750] sm:$0xff]
        %v1174 = vld [vmem:[#allocation10 + $0x758] sm:$0xff]
        %v1175 = vld [vmem:[#allocation10 + $0x760] sm:$0xff]
        %v1176 = vld [vmem:[#allocation10 + $0x768] sm:$0xff]
        %v1177 = vld [vmem:[#allocation10 + $0x770] sm:$0xff]
        %v1178 = vld [vmem:[#allocation10 + $0x778] sm:$0xff]
        %v1179 = vld [vmem:[#allocation10 + $0x780] sm:$0xff]
        %v1180 = vld [vmem:[#allocation10 + $0x788] sm:$0xff]
        %v1181 = vld [vmem:[#allocation10 + $0x790] sm:$0xff]
        %v1182 = vld [vmem:[#allocation10 + $0x798] sm:$0xff]
        %v1183 = vld [vmem:[#allocation10 + $0x7a0] sm:$0xff]
        %v1184 = vld [vmem:[#allocation10 + $0x7a8] sm:$0xff]
        %v1185 = vld [vmem:[#allocation10 + $0x7b0] sm:$0xff]
        %v1186 = vld [vmem:[#allocation10 + $0x7b8] sm:$0xff]
        %v1187 = vld [vmem:[#allocation10 + $0x7c0] sm:$0xff]
        %v1188 = vld [vmem:[#allocation10 + $0x7c8] sm:$0xff]
        %v1189 = vld [vmem:[#allocation10 + $0x7d0] sm:$0xff]
        %v1190 = vld [vmem:[#allocation10 + $0x7d8] sm:$0xff]
        %v1191 = vld [vmem:[#allocation10 + $0x7e0] sm:$0xff]
        %v1192 = vld [vmem:[#allocation10 + $0x7e8] sm:$0xff]
        %v1193 = vld [vmem:[#allocation10 + $0x7f0] sm:$0xff]
        %v1194 = vld [vmem:[#allocation10 + $0x7f8] sm:$0xff]
        %v1195 = vld [vmem:[%s5] sm:$0xf]
        %v1197 = vperm.slane %v1195, 0
        %v1198 = vperm.slane %v1195, 1
        %v1199 = vperm.slane %v1195, 2
        %v1200 = vperm.slane %v1195, 3
        %v1225 = vunpack.c.l.b16 %v919
        %v1226 = vunpack.c.h.b16 %v919
        %v1227 = vunpack.c.l.b16 %v920
        %v1228 = vunpack.c.h.b16 %v920
        %v1229 = vunpack.c.l.b16 %v921
        %v1230 = vunpack.c.h.b16 %v921
        %v1231 = vunpack.c.l.b16 %v922
        %v1232 = vunpack.c.h.b16 %v922
        %v1233 = vunpack.c.l.b16 %v923
        %v1234 = vunpack.c.h.b16 %v923
        %v1235 = vunpack.c.l.b16 %v924
        %v1236 = vunpack.c.h.b16 %v924
        %v1237 = vunpack.c.l.b16 %v925
        %v1238 = vunpack.c.h.b16 %v925
        %v1239 = vunpack.c.l.b16 %v926
        %v1240 = vunpack.c.h.b16 %v926
        %v1241 = vunpack.c.l.b16 %v927
        %v1242 = vunpack.c.h.b16 %v927
        %v1243 = vunpack.c.l.b16 %v928
        %v1244 = vunpack.c.h.b16 %v928
        %v1245 = vunpack.c.l.b16 %v929
        %v1246 = vunpack.c.h.b16 %v929
        %v1247 = vunpack.c.l.b16 %v930
        %v1248 = vunpack.c.h.b16 %v930
        %v1249 = vunpack.c.l.b16 %v931
        %v1250 = vunpack.c.h.b16 %v931
        %v1251 = vunpack.c.l.b16 %v932
        %v1252 = vunpack.c.h.b16 %v932
        %v1253 = vunpack.c.l.b16 %v933
        %v1254 = vunpack.c.h.b16 %v933
        %v1255 = vunpack.c.l.b16 %v934
        %v1256 = vunpack.c.h.b16 %v934
        %v1257 = vunpack.c.l.b16 %v935
        %v1258 = vunpack.c.h.b16 %v935
        %v1259 = vunpack.c.l.b16 %v936
        %v1260 = vunpack.c.h.b16 %v936
        %v1261 = vunpack.c.l.b16 %v937
        %v1262 = vunpack.c.h.b16 %v937
        %v1263 = vunpack.c.l.b16 %v938
        %v1264 = vunpack.c.h.b16 %v938
        %v1265 = vpack.c.b16 %v1233, %v1225
        %v1266 = vpack.c.b16 %v1234, %v1226
        %v1267 = vpack.c.b16 %v1235, %v1227
        %v1268 = vpack.c.b16 %v1236, %v1228
        %v1269 = vpack.c.b16 %v1237, %v1229
        %v1270 = vpack.c.b16 %v1238, %v1230
        %v1271 = vpack.c.b16 %v1239, %v1231
        %v1272 = vpack.c.b16 %v1240, %v1232
        %v1273 = vpack.c.b16 %v1249, %v1241
        %v1274 = vpack.c.b16 %v1250, %v1242
        %v1275 = vpack.c.b16 %v1251, %v1243
        %v1276 = vpack.c.b16 %v1252, %v1244
        %v1277 = vpack.c.b16 %v1253, %v1245
        %v1278 = vpack.c.b16 %v1254, %v1246
        %v1279 = vpack.c.b16 %v1255, %v1247
        %v1280 = vpack.c.b16 %v1256, %v1248
        %v1281 = vpack.c.b16 %v1257, %v1257
        %v1282 = vpack.c.b16 %v1258, %v1258
        %v1283 = vpack.c.b16 %v1259, %v1259
        %v1284 = vpack.c.b16 %v1260, %v1260
        %v1285 = vpack.c.b16 %v1261, %v1261
        %v1286 = vpack.c.b16 %v1262, %v1262
        %v1287 = vpack.c.b16 %v1263, %v1263
        %v1288 = vpack.c.b16 %v1264, %v1264
        %v1569 = vunpack.c.l.b16 %v939
        %v1570 = vunpack.c.h.b16 %v939
        %v1571 = vunpack.c.l.b16 %v940
        %v1572 = vunpack.c.h.b16 %v940
        %v1573 = vunpack.c.l.b16 %v941
        %v1574 = vunpack.c.h.b16 %v941
        %v1575 = vunpack.c.l.b16 %v942
        %v1576 = vunpack.c.h.b16 %v942
        %v1577 = vunpack.c.l.b16 %v943
        %v1578 = vunpack.c.h.b16 %v943
        %v1579 = vunpack.c.l.b16 %v944
        %v1580 = vunpack.c.h.b16 %v944
        %v1581 = vunpack.c.l.b16 %v945
        %v1582 = vunpack.c.h.b16 %v945
        %v1583 = vunpack.c.l.b16 %v946
        %v1584 = vunpack.c.h.b16 %v946
        %v1585 = vunpack.c.l.b16 %v947
        %v1586 = vunpack.c.h.b16 %v947
        %v1587 = vunpack.c.l.b16 %v948
        %v1588 = vunpack.c.h.b16 %v948
        %v1589 = vunpack.c.l.b16 %v949
        %v1590 = vunpack.c.h.b16 %v949
        %v1591 = vunpack.c.l.b16 %v950
        %v1592 = vunpack.c.h.b16 %v950
        %v1593 = vunpack.c.l.b16 %v951
        %v1594 = vunpack.c.h.b16 %v951
        %v1595 = vunpack.c.l.b16 %v952
        %v1596 = vunpack.c.h.b16 %v952
        %v1597 = vunpack.c.l.b16 %v953
        %v1598 = vunpack.c.h.b16 %v953
        %v1599 = vunpack.c.l.b16 %v954
        %v1600 = vunpack.c.h.b16 %v954
        %v1601 = vunpack.c.l.b16 %v955
        %v1602 = vunpack.c.h.b16 %v955
        %v1603 = vunpack.c.l.b16 %v956
        %v1604 = vunpack.c.h.b16 %v956
        %v1605 = vunpack.c.l.b16 %v957
        %v1606 = vunpack.c.h.b16 %v957
        %v1607 = vunpack.c.l.b16 %v958
        %v1608 = vunpack.c.h.b16 %v958
        %v1609 = vunpack.c.l.b16 %v959
        %v1610 = vunpack.c.h.b16 %v959
        %v1611 = vunpack.c.l.b16 %v960
        %v1612 = vunpack.c.h.b16 %v960
        %v1613 = vunpack.c.l.b16 %v961
        %v1614 = vunpack.c.h.b16 %v961
        %v1615 = vunpack.c.l.b16 %v962
        %v1616 = vunpack.c.h.b16 %v962
        %v1617 = vunpack.c.l.b16 %v963
        %v1618 = vunpack.c.h.b16 %v963
        %v1619 = vunpack.c.l.b16 %v964
        %v1620 = vunpack.c.h.b16 %v964
        %v1621 = vunpack.c.l.b16 %v965
        %v1622 = vunpack.c.h.b16 %v965
        %v1623 = vunpack.c.l.b16 %v966
        %v1624 = vunpack.c.h.b16 %v966
        %v1625 = vunpack.c.l.b16 %v967
        %v1626 = vunpack.c.h.b16 %v967
        %v1627 = vunpack.c.l.b16 %v968
        %v1628 = vunpack.c.h.b16 %v968
        %v1629 = vunpack.c.l.b16 %v969
        %v1630 = vunpack.c.h.b16 %v969
        %v1631 = vunpack.c.l.b16 %v970
        %v1632 = vunpack.c.h.b16 %v970
        %v1633 = vunpack.c.l.b16 %v971
        %v1634 = vunpack.c.h.b16 %v971
        %v1635 = vunpack.c.l.b16 %v972
        %v1636 = vunpack.c.h.b16 %v972
        %v1637 = vunpack.c.l.b16 %v973
        %v1638 = vunpack.c.h.b16 %v973
        %v1639 = vunpack.c.l.b16 %v974
        %v1640 = vunpack.c.h.b16 %v974
        %v1641 = vunpack.c.l.b16 %v975
        %v1642 = vunpack.c.h.b16 %v975
        %v1643 = vunpack.c.l.b16 %v976
        %v1644 = vunpack.c.h.b16 %v976
        %v1645 = vunpack.c.l.b16 %v977
        %v1646 = vunpack.c.h.b16 %v977
        %v1647 = vunpack.c.l.b16 %v978
        %v1648 = vunpack.c.h.b16 %v978
        %v1649 = vunpack.c.l.b16 %v979
        %v1650 = vunpack.c.h.b16 %v979
        %v1651 = vunpack.c.l.b16 %v980
        %v1652 = vunpack.c.h.b16 %v980
        %v1653 = vunpack.c.l.b16 %v981
        %v1654 = vunpack.c.h.b16 %v981
        %v1655 = vunpack.c.l.b16 %v982
        %v1656 = vunpack.c.h.b16 %v982
        %v1657 = vunpack.c.l.b16 %v983
        %v1658 = vunpack.c.h.b16 %v983
        %v1659 = vunpack.c.l.b16 %v984
        %v1660 = vunpack.c.h.b16 %v984
        %v1661 = vunpack.c.l.b16 %v985
        %v1662 = vunpack.c.h.b16 %v985
        %v1663 = vunpack.c.l.b16 %v986
        %v1664 = vunpack.c.h.b16 %v986
        %v1665 = vunpack.c.l.b16 %v987
        %v1666 = vunpack.c.h.b16 %v987
        %v1667 = vunpack.c.l.b16 %v988
        %v1668 = vunpack.c.h.b16 %v988
        %v1669 = vunpack.c.l.b16 %v989
        %v1670 = vunpack.c.h.b16 %v989
        %v1671 = vunpack.c.l.b16 %v990
        %v1672 = vunpack.c.h.b16 %v990
        %v1673 = vunpack.c.l.b16 %v991
        %v1674 = vunpack.c.h.b16 %v991
        %v1675 = vunpack.c.l.b16 %v992
        %v1676 = vunpack.c.h.b16 %v992
        %v1677 = vunpack.c.l.b16 %v993
        %v1678 = vunpack.c.h.b16 %v993
        %v1679 = vunpack.c.l.b16 %v994
        %v1680 = vunpack.c.h.b16 %v994
        %v1681 = vunpack.c.l.b16 %v995
        %v1682 = vunpack.c.h.b16 %v995
        %v1683 = vunpack.c.l.b16 %v996
        %v1684 = vunpack.c.h.b16 %v996
        %v1685 = vunpack.c.l.b16 %v997
        %v1686 = vunpack.c.h.b16 %v997
        %v1687 = vunpack.c.l.b16 %v998
        %v1688 = vunpack.c.h.b16 %v998
        %v1689 = vunpack.c.l.b16 %v999
        %v1690 = vunpack.c.h.b16 %v999
        %v1691 = vunpack.c.l.b16 %v1000
        %v1692 = vunpack.c.h.b16 %v1000
        %v1693 = vunpack.c.l.b16 %v1001
        %v1694 = vunpack.c.h.b16 %v1001
        %v1695 = vunpack.c.l.b16 %v1002
        %v1696 = vunpack.c.h.b16 %v1002
        %v1697 = vunpack.c.l.b16 %v1003
        %v1698 = vunpack.c.h.b16 %v1003
        %v1699 = vunpack.c.l.b16 %v1004
        %v1700 = vunpack.c.h.b16 %v1004
        %v1701 = vunpack.c.l.b16 %v1005
        %v1702 = vunpack.c.h.b16 %v1005
        %v1703 = vunpack.c.l.b16 %v1006
        %v1704 = vunpack.c.h.b16 %v1006
        %v1705 = vunpack.c.l.b16 %v1007
        %v1706 = vunpack.c.h.b16 %v1007
        %v1707 = vunpack.c.l.b16 %v1008
        %v1708 = vunpack.c.h.b16 %v1008
        %v1709 = vunpack.c.l.b16 %v1009
        %v1710 = vunpack.c.h.b16 %v1009
        %v1711 = vunpack.c.l.b16 %v1010
        %v1712 = vunpack.c.h.b16 %v1010
        %v1713 = vunpack.c.l.b16 %v1011
        %v1714 = vunpack.c.h.b16 %v1011
        %v1715 = vunpack.c.l.b16 %v1012
        %v1716 = vunpack.c.h.b16 %v1012
        %v1717 = vunpack.c.l.b16 %v1013
        %v1718 = vunpack.c.h.b16 %v1013
        %v1719 = vunpack.c.l.b16 %v1014
        %v1720 = vunpack.c.h.b16 %v1014
        %v1721 = vunpack.c.l.b16 %v1015
        %v1722 = vunpack.c.h.b16 %v1015
        %v1723 = vunpack.c.l.b16 %v1016
        %v1724 = vunpack.c.h.b16 %v1016
        %v1725 = vunpack.c.l.b16 %v1017
        %v1726 = vunpack.c.h.b16 %v1017
        %v1727 = vunpack.c.l.b16 %v1018
        %v1728 = vunpack.c.h.b16 %v1018
        %v1729 = vunpack.c.l.b16 %v1019
        %v1730 = vunpack.c.h.b16 %v1019
        %v1731 = vunpack.c.l.b16 %v1020
        %v1732 = vunpack.c.h.b16 %v1020
        %v1733 = vunpack.c.l.b16 %v1021
        %v1734 = vunpack.c.h.b16 %v1021
        %v1735 = vunpack.c.l.b16 %v1022
        %v1736 = vunpack.c.h.b16 %v1022
        %v1737 = vunpack.c.l.b16 %v1023
        %v1738 = vunpack.c.h.b16 %v1023
        %v1739 = vunpack.c.l.b16 %v1024
        %v1740 = vunpack.c.h.b16 %v1024
        %v1741 = vunpack.c.l.b16 %v1025
        %v1742 = vunpack.c.h.b16 %v1025
        %v1743 = vunpack.c.l.b16 %v1026
        %v1744 = vunpack.c.h.b16 %v1026
        %v1745 = vunpack.c.l.b16 %v1027
        %v1746 = vunpack.c.h.b16 %v1027
        %v1747 = vunpack.c.l.b16 %v1028
        %v1748 = vunpack.c.h.b16 %v1028
        %v1749 = vunpack.c.l.b16 %v1029
        %v1750 = vunpack.c.h.b16 %v1029
        %v1751 = vunpack.c.l.b16 %v1030
        %v1752 = vunpack.c.h.b16 %v1030
        %v1753 = vunpack.c.l.b16 %v1031
        %v1754 = vunpack.c.h.b16 %v1031
        %v1755 = vunpack.c.l.b16 %v1032
        %v1756 = vunpack.c.h.b16 %v1032
        %v1757 = vunpack.c.l.b16 %v1033
        %v1758 = vunpack.c.h.b16 %v1033
        %v1759 = vunpack.c.l.b16 %v1034
        %v1760 = vunpack.c.h.b16 %v1034
        %v1761 = vunpack.c.l.b16 %v1035
        %v1762 = vunpack.c.h.b16 %v1035
        %v1763 = vunpack.c.l.b16 %v1036
        %v1764 = vunpack.c.h.b16 %v1036
        %v1765 = vunpack.c.l.b16 %v1037
        %v1766 = vunpack.c.h.b16 %v1037
        %v1767 = vunpack.c.l.b16 %v1038
        %v1768 = vunpack.c.h.b16 %v1038
        %v1769 = vunpack.c.l.b16 %v1039
        %v1770 = vunpack.c.h.b16 %v1039
        %v1771 = vunpack.c.l.b16 %v1040
        %v1772 = vunpack.c.h.b16 %v1040
        %v1773 = vunpack.c.l.b16 %v1041
        %v1774 = vunpack.c.h.b16 %v1041
        %v1775 = vunpack.c.l.b16 %v1042
        %v1776 = vunpack.c.h.b16 %v1042
        %v1777 = vunpack.c.l.b16 %v1043
        %v1778 = vunpack.c.h.b16 %v1043
        %v1779 = vunpack.c.l.b16 %v1044
        %v1780 = vunpack.c.h.b16 %v1044
        %v1781 = vunpack.c.l.b16 %v1045
        %v1782 = vunpack.c.h.b16 %v1045
        %v1783 = vunpack.c.l.b16 %v1046
        %v1784 = vunpack.c.h.b16 %v1046
        %v1785 = vunpack.c.l.b16 %v1047
        %v1786 = vunpack.c.h.b16 %v1047
        %v1787 = vunpack.c.l.b16 %v1048
        %v1788 = vunpack.c.h.b16 %v1048
        %v1789 = vunpack.c.l.b16 %v1049
        %v1790 = vunpack.c.h.b16 %v1049
        %v1791 = vunpack.c.l.b16 %v1050
        %v1792 = vunpack.c.h.b16 %v1050
        %v1793 = vunpack.c.l.b16 %v1051
        %v1794 = vunpack.c.h.b16 %v1051
        %v1795 = vunpack.c.l.b16 %v1052
        %v1796 = vunpack.c.h.b16 %v1052
        %v1797 = vunpack.c.l.b16 %v1053
        %v1798 = vunpack.c.h.b16 %v1053
        %v1799 = vunpack.c.l.b16 %v1054
        %v1800 = vunpack.c.h.b16 %v1054
        %v1801 = vunpack.c.l.b16 %v1055
        %v1802 = vunpack.c.h.b16 %v1055
        %v1803 = vunpack.c.l.b16 %v1056
        %v1804 = vunpack.c.h.b16 %v1056
        %v1805 = vunpack.c.l.b16 %v1057
        %v1806 = vunpack.c.h.b16 %v1057
        %v1807 = vunpack.c.l.b16 %v1058
        %v1808 = vunpack.c.h.b16 %v1058
        %v1809 = vunpack.c.l.b16 %v1059
        %v1810 = vunpack.c.h.b16 %v1059
        %v1811 = vunpack.c.l.b16 %v1060
        %v1812 = vunpack.c.h.b16 %v1060
        %v1813 = vunpack.c.l.b16 %v1061
        %v1814 = vunpack.c.h.b16 %v1061
        %v1815 = vunpack.c.l.b16 %v1062
        %v1816 = vunpack.c.h.b16 %v1062
        %v1817 = vunpack.c.l.b16 %v1063
        %v1818 = vunpack.c.h.b16 %v1063
        %v1819 = vunpack.c.l.b16 %v1064
        %v1820 = vunpack.c.h.b16 %v1064
        %v1821 = vunpack.c.l.b16 %v1065
        %v1822 = vunpack.c.h.b16 %v1065
        %v1823 = vunpack.c.l.b16 %v1066
        %v1824 = vunpack.c.h.b16 %v1066
        %v1825 = vunpack.c.l.b16 %v1067
        %v1826 = vunpack.c.h.b16 %v1067
        %v1827 = vunpack.c.l.b16 %v1068
        %v1828 = vunpack.c.h.b16 %v1068
        %v1829 = vunpack.c.l.b16 %v1069
        %v1830 = vunpack.c.h.b16 %v1069
        %v1831 = vunpack.c.l.b16 %v1070
        %v1832 = vunpack.c.h.b16 %v1070
        %v1833 = vunpack.c.l.b16 %v1071
        %v1834 = vunpack.c.h.b16 %v1071
        %v1835 = vunpack.c.l.b16 %v1072
        %v1836 = vunpack.c.h.b16 %v1072
        %v1837 = vunpack.c.l.b16 %v1073
        %v1838 = vunpack.c.h.b16 %v1073
        %v1839 = vunpack.c.l.b16 %v1074
        %v1840 = vunpack.c.h.b16 %v1074
        %v1841 = vunpack.c.l.b16 %v1075
        %v1842 = vunpack.c.h.b16 %v1075
        %v1843 = vunpack.c.l.b16 %v1076
        %v1844 = vunpack.c.h.b16 %v1076
        %v1845 = vunpack.c.l.b16 %v1077
        %v1846 = vunpack.c.h.b16 %v1077
        %v1847 = vunpack.c.l.b16 %v1078
        %v1848 = vunpack.c.h.b16 %v1078
        %v1849 = vunpack.c.l.b16 %v1079
        %v1850 = vunpack.c.h.b16 %v1079
        %v1851 = vunpack.c.l.b16 %v1080
        %v1852 = vunpack.c.h.b16 %v1080
        %v1853 = vunpack.c.l.b16 %v1081
        %v1854 = vunpack.c.h.b16 %v1081
        %v1855 = vunpack.c.l.b16 %v1082
        %v1856 = vunpack.c.h.b16 %v1082
        %v1857 = vunpack.c.l.b16 %v1083
        %v1858 = vunpack.c.h.b16 %v1083
        %v1859 = vunpack.c.l.b16 %v1084
        %v1860 = vunpack.c.h.b16 %v1084
        %v1861 = vunpack.c.l.b16 %v1085
        %v1862 = vunpack.c.h.b16 %v1085
        %v1863 = vunpack.c.l.b16 %v1086
        %v1864 = vunpack.c.h.b16 %v1086
        %v1865 = vunpack.c.l.b16 %v1087
        %v1866 = vunpack.c.h.b16 %v1087
        %v1867 = vunpack.c.l.b16 %v1088
        %v1868 = vunpack.c.h.b16 %v1088
        %v1869 = vunpack.c.l.b16 %v1089
        %v1870 = vunpack.c.h.b16 %v1089
        %v1871 = vunpack.c.l.b16 %v1090
        %v1872 = vunpack.c.h.b16 %v1090
        %v1873 = vunpack.c.l.b16 %v1091
        %v1874 = vunpack.c.h.b16 %v1091
        %v1875 = vunpack.c.l.b16 %v1092
        %v1876 = vunpack.c.h.b16 %v1092
        %v1877 = vunpack.c.l.b16 %v1093
        %v1878 = vunpack.c.h.b16 %v1093
        %v1879 = vunpack.c.l.b16 %v1094
        %v1880 = vunpack.c.h.b16 %v1094
        %v1881 = vunpack.c.l.b16 %v1095
        %v1882 = vunpack.c.h.b16 %v1095
        %v1883 = vunpack.c.l.b16 %v1096
        %v1884 = vunpack.c.h.b16 %v1096
        %v1885 = vunpack.c.l.b16 %v1097
        %v1886 = vunpack.c.h.b16 %v1097
        %v1887 = vunpack.c.l.b16 %v1098
        %v1888 = vunpack.c.h.b16 %v1098
        %v1889 = vunpack.c.l.b16 %v1099
        %v1890 = vunpack.c.h.b16 %v1099
        %v1891 = vunpack.c.l.b16 %v1100
        %v1892 = vunpack.c.h.b16 %v1100
        %v1893 = vunpack.c.l.b16 %v1101
        %v1894 = vunpack.c.h.b16 %v1101
        %v1895 = vunpack.c.l.b16 %v1102
        %v1896 = vunpack.c.h.b16 %v1102
        %v1897 = vunpack.c.l.b16 %v1103
        %v1898 = vunpack.c.h.b16 %v1103
        %v1899 = vunpack.c.l.b16 %v1104
        %v1900 = vunpack.c.h.b16 %v1104
        %v1901 = vunpack.c.l.b16 %v1105
        %v1902 = vunpack.c.h.b16 %v1105
        %v1903 = vunpack.c.l.b16 %v1106
        %v1904 = vunpack.c.h.b16 %v1106
        %v1905 = vunpack.c.l.b16 %v1107
        %v1906 = vunpack.c.h.b16 %v1107
        %v1907 = vunpack.c.l.b16 %v1108
        %v1908 = vunpack.c.h.b16 %v1108
        %v1909 = vunpack.c.l.b16 %v1109
        %v1910 = vunpack.c.h.b16 %v1109
        %v1911 = vunpack.c.l.b16 %v1110
        %v1912 = vunpack.c.h.b16 %v1110
        %v1913 = vunpack.c.l.b16 %v1111
        %v1914 = vunpack.c.h.b16 %v1111
        %v1915 = vunpack.c.l.b16 %v1112
        %v1916 = vunpack.c.h.b16 %v1112
        %v1917 = vunpack.c.l.b16 %v1113
        %v1918 = vunpack.c.h.b16 %v1113
        %v1919 = vunpack.c.l.b16 %v1114
        %v1920 = vunpack.c.h.b16 %v1114
        %v1921 = vunpack.c.l.b16 %v1115
        %v1922 = vunpack.c.h.b16 %v1115
        %v1923 = vunpack.c.l.b16 %v1116
        %v1924 = vunpack.c.h.b16 %v1116
        %v1925 = vunpack.c.l.b16 %v1117
        %v1926 = vunpack.c.h.b16 %v1117
        %v1927 = vunpack.c.l.b16 %v1118
        %v1928 = vunpack.c.h.b16 %v1118
        %v1929 = vunpack.c.l.b16 %v1119
        %v1930 = vunpack.c.h.b16 %v1119
        %v1931 = vunpack.c.l.b16 %v1120
        %v1932 = vunpack.c.h.b16 %v1120
        %v1933 = vunpack.c.l.b16 %v1121
        %v1934 = vunpack.c.h.b16 %v1121
        %v1935 = vunpack.c.l.b16 %v1122
        %v1936 = vunpack.c.h.b16 %v1122
        %v1937 = vunpack.c.l.b16 %v1123
        %v1938 = vunpack.c.h.b16 %v1123
        %v1939 = vunpack.c.l.b16 %v1124
        %v1940 = vunpack.c.h.b16 %v1124
        %v1941 = vunpack.c.l.b16 %v1125
        %v1942 = vunpack.c.h.b16 %v1125
        %v1943 = vunpack.c.l.b16 %v1126
        %v1944 = vunpack.c.h.b16 %v1126
        %v1945 = vunpack.c.l.b16 %v1127
        %v1946 = vunpack.c.h.b16 %v1127
        %v1947 = vunpack.c.l.b16 %v1128
        %v1948 = vunpack.c.h.b16 %v1128
        %v1949 = vunpack.c.l.b16 %v1129
        %v1950 = vunpack.c.h.b16 %v1129
        %v1951 = vunpack.c.l.b16 %v1130
        %v1952 = vunpack.c.h.b16 %v1130
        %v1953 = vunpack.c.l.b16 %v1131
        %v1954 = vunpack.c.h.b16 %v1131
        %v1955 = vunpack.c.l.b16 %v1132
        %v1956 = vunpack.c.h.b16 %v1132
        %v1957 = vunpack.c.l.b16 %v1133
        %v1958 = vunpack.c.h.b16 %v1133
        %v1959 = vunpack.c.l.b16 %v1134
        %v1960 = vunpack.c.h.b16 %v1134
        %v1961 = vunpack.c.l.b16 %v1135
        %v1962 = vunpack.c.h.b16 %v1135
        %v1963 = vunpack.c.l.b16 %v1136
        %v1964 = vunpack.c.h.b16 %v1136
        %v1965 = vunpack.c.l.b16 %v1137
        %v1966 = vunpack.c.h.b16 %v1137
        %v1967 = vunpack.c.l.b16 %v1138
        %v1968 = vunpack.c.h.b16 %v1138
        %v1969 = vunpack.c.l.b16 %v1139
        %v1970 = vunpack.c.h.b16 %v1139
        %v1971 = vunpack.c.l.b16 %v1140
        %v1972 = vunpack.c.h.b16 %v1140
        %v1973 = vunpack.c.l.b16 %v1141
        %v1974 = vunpack.c.h.b16 %v1141
        %v1975 = vunpack.c.l.b16 %v1142
        %v1976 = vunpack.c.h.b16 %v1142
        %v1977 = vunpack.c.l.b16 %v1143
        %v1978 = vunpack.c.h.b16 %v1143
        %v1979 = vunpack.c.l.b16 %v1144
        %v1980 = vunpack.c.h.b16 %v1144
        %v1981 = vunpack.c.l.b16 %v1145
        %v1982 = vunpack.c.h.b16 %v1145
        %v1983 = vunpack.c.l.b16 %v1146
        %v1984 = vunpack.c.h.b16 %v1146
        %v1985 = vunpack.c.l.b16 %v1147
        %v1986 = vunpack.c.h.b16 %v1147
        %v1987 = vunpack.c.l.b16 %v1148
        %v1988 = vunpack.c.h.b16 %v1148
        %v1989 = vunpack.c.l.b16 %v1149
        %v1990 = vunpack.c.h.b16 %v1149
        %v1991 = vunpack.c.l.b16 %v1150
        %v1992 = vunpack.c.h.b16 %v1150
        %v1993 = vunpack.c.l.b16 %v1151
        %v1994 = vunpack.c.h.b16 %v1151
        %v1995 = vunpack.c.l.b16 %v1152
        %v1996 = vunpack.c.h.b16 %v1152
        %v1997 = vunpack.c.l.b16 %v1153
        %v1998 = vunpack.c.h.b16 %v1153
        %v1999 = vunpack.c.l.b16 %v1154
        %v2000 = vunpack.c.h.b16 %v1154
        %v2001 = vunpack.c.l.b16 %v1155
        %v2002 = vunpack.c.h.b16 %v1155
        %v2003 = vunpack.c.l.b16 %v1156
        %v2004 = vunpack.c.h.b16 %v1156
        %v2005 = vunpack.c.l.b16 %v1157
        %v2006 = vunpack.c.h.b16 %v1157
        %v2007 = vunpack.c.l.b16 %v1158
        %v2008 = vunpack.c.h.b16 %v1158
        %v2009 = vunpack.c.l.b16 %v1159
        %v2010 = vunpack.c.h.b16 %v1159
        %v2011 = vunpack.c.l.b16 %v1160
        %v2012 = vunpack.c.h.b16 %v1160
        %v2013 = vunpack.c.l.b16 %v1161
        %v2014 = vunpack.c.h.b16 %v1161
        %v2015 = vunpack.c.l.b16 %v1162
        %v2016 = vunpack.c.h.b16 %v1162
        %v2017 = vunpack.c.l.b16 %v1163
        %v2018 = vunpack.c.h.b16 %v1163
        %v2019 = vunpack.c.l.b16 %v1164
        %v2020 = vunpack.c.h.b16 %v1164
        %v2021 = vunpack.c.l.b16 %v1165
        %v2022 = vunpack.c.h.b16 %v1165
        %v2023 = vunpack.c.l.b16 %v1166
        %v2024 = vunpack.c.h.b16 %v1166
        %v2025 = vunpack.c.l.b16 %v1167
        %v2026 = vunpack.c.h.b16 %v1167
        %v2027 = vunpack.c.l.b16 %v1168
        %v2028 = vunpack.c.h.b16 %v1168
        %v2029 = vunpack.c.l.b16 %v1169
        %v2030 = vunpack.c.h.b16 %v1169
        %v2031 = vunpack.c.l.b16 %v1170
        %v2032 = vunpack.c.h.b16 %v1170
        %v2033 = vunpack.c.l.b16 %v1171
        %v2034 = vunpack.c.h.b16 %v1171
        %v2035 = vunpack.c.l.b16 %v1172
        %v2036 = vunpack.c.h.b16 %v1172
        %v2037 = vunpack.c.l.b16 %v1173
        %v2038 = vunpack.c.h.b16 %v1173
        %v2039 = vunpack.c.l.b16 %v1174
        %v2040 = vunpack.c.h.b16 %v1174
        %v2041 = vunpack.c.l.b16 %v1175
        %v2042 = vunpack.c.h.b16 %v1175
        %v2043 = vunpack.c.l.b16 %v1176
        %v2044 = vunpack.c.h.b16 %v1176
        %v2045 = vunpack.c.l.b16 %v1177
        %v2046 = vunpack.c.h.b16 %v1177
        %v2047 = vunpack.c.l.b16 %v1178
        %v2048 = vunpack.c.h.b16 %v1178
        %v2049 = vunpack.c.l.b16 %v1179
        %v2050 = vunpack.c.h.b16 %v1179
        %v2051 = vunpack.c.l.b16 %v1180
        %v2052 = vunpack.c.h.b16 %v1180
        %v2053 = vunpack.c.l.b16 %v1181
        %v2054 = vunpack.c.h.b16 %v1181
        %v2055 = vunpack.c.l.b16 %v1182
        %v2056 = vunpack.c.h.b16 %v1182
        %v2057 = vunpack.c.l.b16 %v1183
        %v2058 = vunpack.c.h.b16 %v1183
        %v2059 = vunpack.c.l.b16 %v1184
        %v2060 = vunpack.c.h.b16 %v1184
        %v2061 = vunpack.c.l.b16 %v1185
        %v2062 = vunpack.c.h.b16 %v1185
        %v2063 = vunpack.c.l.b16 %v1186
        %v2064 = vunpack.c.h.b16 %v1186
        %v2065 = vunpack.c.l.b16 %v1187
        %v2066 = vunpack.c.h.b16 %v1187
        %v2067 = vunpack.c.l.b16 %v1188
        %v2068 = vunpack.c.h.b16 %v1188
        %v2069 = vunpack.c.l.b16 %v1189
        %v2070 = vunpack.c.h.b16 %v1189
        %v2071 = vunpack.c.l.b16 %v1190
        %v2072 = vunpack.c.h.b16 %v1190
        %v2073 = vunpack.c.l.b16 %v1191
        %v2074 = vunpack.c.h.b16 %v1191
        %v2075 = vunpack.c.l.b16 %v1192
        %v2076 = vunpack.c.h.b16 %v1192
        %v2077 = vunpack.c.l.b16 %v1193
        %v2078 = vunpack.c.h.b16 %v1193
        %v2079 = vunpack.c.l.b16 %v1194
        %v2080 = vunpack.c.h.b16 %v1194
        %v2081 = vpack.c.b16 %v1573, %v1569
        %v2082 = vpack.c.b16 %v1574, %v1570
        %v2083 = vpack.c.b16 %v1575, %v1571
        %v2084 = vpack.c.b16 %v1576, %v1572
        %v2085 = vpack.c.b16 %v1581, %v1577
        %v2086 = vpack.c.b16 %v1582, %v1578
        %v2087 = vpack.c.b16 %v1583, %v1579
        %v2088 = vpack.c.b16 %v1584, %v1580
        %v2089 = vpack.c.b16 %v1589, %v1585
        %v2090 = vpack.c.b16 %v1590, %v1586
        %v2091 = vpack.c.b16 %v1591, %v1587
        %v2092 = vpack.c.b16 %v1592, %v1588
        %v2093 = vpack.c.b16 %v1597, %v1593
        %v2094 = vpack.c.b16 %v1598, %v1594
        %v2095 = vpack.c.b16 %v1599, %v1595
        %v2096 = vpack.c.b16 %v1600, %v1596
        %v2097 = vpack.c.b16 %v1605, %v1601
        %v2098 = vpack.c.b16 %v1606, %v1602
        %v2099 = vpack.c.b16 %v1607, %v1603
        %v2100 = vpack.c.b16 %v1608, %v1604
        %v2101 = vpack.c.b16 %v1613, %v1609
        %v2102 = vpack.c.b16 %v1614, %v1610
        %v2103 = vpack.c.b16 %v1615, %v1611
        %v2104 = vpack.c.b16 %v1616, %v1612
        %v2105 = vpack.c.b16 %v1621, %v1617
        %v2106 = vpack.c.b16 %v1622, %v1618
        %v2107 = vpack.c.b16 %v1623, %v1619
        %v2108 = vpack.c.b16 %v1624, %v1620
        %v2109 = vpack.c.b16 %v1629, %v1625
        %v2110 = vpack.c.b16 %v1630, %v1626
        %v2111 = vpack.c.b16 %v1631, %v1627
        %v2112 = vpack.c.b16 %v1632, %v1628
        %v2113 = vpack.c.b16 %v1637, %v1633
        %v2114 = vpack.c.b16 %v1638, %v1634
        %v2115 = vpack.c.b16 %v1639, %v1635
        %v2116 = vpack.c.b16 %v1640, %v1636
        %v2117 = vpack.c.b16 %v1645, %v1641
        %v2118 = vpack.c.b16 %v1646, %v1642
        %v2119 = vpack.c.b16 %v1647, %v1643
        %v2120 = vpack.c.b16 %v1648, %v1644
        %v2121 = vpack.c.b16 %v1653, %v1649
        %v2122 = vpack.c.b16 %v1654, %v1650
        %v2123 = vpack.c.b16 %v1655, %v1651
        %v2124 = vpack.c.b16 %v1656, %v1652
        %v2125 = vpack.c.b16 %v1661, %v1657
        %v2126 = vpack.c.b16 %v1662, %v1658
        %v2127 = vpack.c.b16 %v1663, %v1659
        %v2128 = vpack.c.b16 %v1664, %v1660
        %v2129 = vpack.c.b16 %v1669, %v1665
        %v2130 = vpack.c.b16 %v1670, %v1666
        %v2131 = vpack.c.b16 %v1671, %v1667
        %v2132 = vpack.c.b16 %v1672, %v1668
        %v2133 = vpack.c.b16 %v1677, %v1673
        %v2134 = vpack.c.b16 %v1678, %v1674
        %v2135 = vpack.c.b16 %v1679, %v1675
        %v2136 = vpack.c.b16 %v1680, %v1676
        %v2137 = vpack.c.b16 %v1685, %v1681
        %v2138 = vpack.c.b16 %v1686, %v1682
        %v2139 = vpack.c.b16 %v1687, %v1683
        %v2140 = vpack.c.b16 %v1688, %v1684
        %v2141 = vpack.c.b16 %v1693, %v1689
        %v2142 = vpack.c.b16 %v1694, %v1690
        %v2143 = vpack.c.b16 %v1695, %v1691
        %v2144 = vpack.c.b16 %v1696, %v1692
        %v2145 = vpack.c.b16 %v1701, %v1697
        %v2146 = vpack.c.b16 %v1702, %v1698
        %v2147 = vpack.c.b16 %v1703, %v1699
        %v2148 = vpack.c.b16 %v1704, %v1700
        %v2149 = vpack.c.b16 %v1709, %v1705
        %v2150 = vpack.c.b16 %v1710, %v1706
        %v2151 = vpack.c.b16 %v1711, %v1707
        %v2152 = vpack.c.b16 %v1712, %v1708
        %v2153 = vpack.c.b16 %v1717, %v1713
        %v2154 = vpack.c.b16 %v1718, %v1714
        %v2155 = vpack.c.b16 %v1719, %v1715
        %v2156 = vpack.c.b16 %v1720, %v1716
        %v2157 = vpack.c.b16 %v1725, %v1721
        %v2158 = vpack.c.b16 %v1726, %v1722
        %v2159 = vpack.c.b16 %v1727, %v1723
        %v2160 = vpack.c.b16 %v1728, %v1724
        %v2161 = vpack.c.b16 %v1733, %v1729
        %v2162 = vpack.c.b16 %v1734, %v1730
        %v2163 = vpack.c.b16 %v1735, %v1731
        %v2164 = vpack.c.b16 %v1736, %v1732
        %v2165 = vpack.c.b16 %v1741, %v1737
        %v2166 = vpack.c.b16 %v1742, %v1738
        %v2167 = vpack.c.b16 %v1743, %v1739
        %v2168 = vpack.c.b16 %v1744, %v1740
        %v2169 = vpack.c.b16 %v1749, %v1745
        %v2170 = vpack.c.b16 %v1750, %v1746
        %v2171 = vpack.c.b16 %v1751, %v1747
        %v2172 = vpack.c.b16 %v1752, %v1748
        %v2173 = vpack.c.b16 %v1757, %v1753
        %v2174 = vpack.c.b16 %v1758, %v1754
        %v2175 = vpack.c.b16 %v1759, %v1755
        %v2176 = vpack.c.b16 %v1760, %v1756
        %v2177 = vpack.c.b16 %v1765, %v1761
        %v2178 = vpack.c.b16 %v1766, %v1762
        %v2179 = vpack.c.b16 %v1767, %v1763
        %v2180 = vpack.c.b16 %v1768, %v1764
        %v2181 = vpack.c.b16 %v1773, %v1769
        %v2182 = vpack.c.b16 %v1774, %v1770
        %v2183 = vpack.c.b16 %v1775, %v1771
        %v2184 = vpack.c.b16 %v1776, %v1772
        %v2185 = vpack.c.b16 %v1781, %v1777
        %v2186 = vpack.c.b16 %v1782, %v1778
        %v2187 = vpack.c.b16 %v1783, %v1779
        %v2188 = vpack.c.b16 %v1784, %v1780
        %v2189 = vpack.c.b16 %v1789, %v1785
        %v2190 = vpack.c.b16 %v1790, %v1786
        %v2191 = vpack.c.b16 %v1791, %v1787
        %v2192 = vpack.c.b16 %v1792, %v1788
        %v2193 = vpack.c.b16 %v1797, %v1793
        %v2194 = vpack.c.b16 %v1798, %v1794
        %v2195 = vpack.c.b16 %v1799, %v1795
        %v2196 = vpack.c.b16 %v1800, %v1796
        %v2197 = vpack.c.b16 %v1805, %v1801
        %v2198 = vpack.c.b16 %v1806, %v1802
        %v2199 = vpack.c.b16 %v1807, %v1803
        %v2200 = vpack.c.b16 %v1808, %v1804
        %v2201 = vpack.c.b16 %v1813, %v1809
        %v2202 = vpack.c.b16 %v1814, %v1810
        %v2203 = vpack.c.b16 %v1815, %v1811
        %v2204 = vpack.c.b16 %v1816, %v1812
        %v2205 = vpack.c.b16 %v1821, %v1817
        %v2206 = vpack.c.b16 %v1822, %v1818
        %v2207 = vpack.c.b16 %v1823, %v1819
        %v2208 = vpack.c.b16 %v1824, %v1820
        %v2209 = vpack.c.b16 %v1829, %v1825
        %v2210 = vpack.c.b16 %v1830, %v1826
        %v2211 = vpack.c.b16 %v1831, %v1827
        %v2212 = vpack.c.b16 %v1832, %v1828
        %v2213 = vpack.c.b16 %v1837, %v1833
        %v2214 = vpack.c.b16 %v1838, %v1834
        %v2215 = vpack.c.b16 %v1839, %v1835
        %v2216 = vpack.c.b16 %v1840, %v1836
        %v2217 = vpack.c.b16 %v1845, %v1841
        %v2218 = vpack.c.b16 %v1846, %v1842
        %v2219 = vpack.c.b16 %v1847, %v1843
        %v2220 = vpack.c.b16 %v1848, %v1844
        %v2221 = vpack.c.b16 %v1853, %v1849
        %v2222 = vpack.c.b16 %v1854, %v1850
        %v2223 = vpack.c.b16 %v1855, %v1851
        %v2224 = vpack.c.b16 %v1856, %v1852
        %v2225 = vpack.c.b16 %v1861, %v1857
        %v2226 = vpack.c.b16 %v1862, %v1858
        %v2227 = vpack.c.b16 %v1863, %v1859
        %v2228 = vpack.c.b16 %v1864, %v1860
        %v2229 = vpack.c.b16 %v1869, %v1865
        %v2230 = vpack.c.b16 %v1870, %v1866
        %v2231 = vpack.c.b16 %v1871, %v1867
        %v2232 = vpack.c.b16 %v1872, %v1868
        %v2233 = vpack.c.b16 %v1877, %v1873
        %v2234 = vpack.c.b16 %v1878, %v1874
        %v2235 = vpack.c.b16 %v1879, %v1875
        %v2236 = vpack.c.b16 %v1880, %v1876
        %v2237 = vpack.c.b16 %v1885, %v1881
        %v2238 = vpack.c.b16 %v1886, %v1882
        %v2239 = vpack.c.b16 %v1887, %v1883
        %v2240 = vpack.c.b16 %v1888, %v1884
        %v2241 = vpack.c.b16 %v1893, %v1889
        %v2242 = vpack.c.b16 %v1894, %v1890
        %v2243 = vpack.c.b16 %v1895, %v1891
        %v2244 = vpack.c.b16 %v1896, %v1892
        %v2245 = vpack.c.b16 %v1901, %v1897
        %v2246 = vpack.c.b16 %v1902, %v1898
        %v2247 = vpack.c.b16 %v1903, %v1899
        %v2248 = vpack.c.b16 %v1904, %v1900
        %v2249 = vpack.c.b16 %v1909, %v1905
        %v2250 = vpack.c.b16 %v1910, %v1906
        %v2251 = vpack.c.b16 %v1911, %v1907
        %v2252 = vpack.c.b16 %v1912, %v1908
        %v2253 = vpack.c.b16 %v1917, %v1913
        %v2254 = vpack.c.b16 %v1918, %v1914
        %v2255 = vpack.c.b16 %v1919, %v1915
        %v2256 = vpack.c.b16 %v1920, %v1916
        %v2257 = vpack.c.b16 %v1925, %v1921
        %v2258 = vpack.c.b16 %v1926, %v1922
        %v2259 = vpack.c.b16 %v1927, %v1923
        %v2260 = vpack.c.b16 %v1928, %v1924
        %v2261 = vpack.c.b16 %v1933, %v1929
        %v2262 = vpack.c.b16 %v1934, %v1930
        %v2263 = vpack.c.b16 %v1935, %v1931
        %v2264 = vpack.c.b16 %v1936, %v1932
        %v2265 = vpack.c.b16 %v1941, %v1937
        %v2266 = vpack.c.b16 %v1942, %v1938
        %v2267 = vpack.c.b16 %v1943, %v1939
        %v2268 = vpack.c.b16 %v1944, %v1940
        %v2269 = vpack.c.b16 %v1949, %v1945
        %v2270 = vpack.c.b16 %v1950, %v1946
        %v2271 = vpack.c.b16 %v1951, %v1947
        %v2272 = vpack.c.b16 %v1952, %v1948
        %v2273 = vpack.c.b16 %v1957, %v1953
        %v2274 = vpack.c.b16 %v1958, %v1954
        %v2275 = vpack.c.b16 %v1959, %v1955
        %v2276 = vpack.c.b16 %v1960, %v1956
        %v2277 = vpack.c.b16 %v1965, %v1961
        %v2278 = vpack.c.b16 %v1966, %v1962
        %v2279 = vpack.c.b16 %v1967, %v1963
        %v2280 = vpack.c.b16 %v1968, %v1964
        %v2281 = vpack.c.b16 %v1973, %v1969
        %v2282 = vpack.c.b16 %v1974, %v1970
        %v2283 = vpack.c.b16 %v1975, %v1971
        %v2284 = vpack.c.b16 %v1976, %v1972
        %v2285 = vpack.c.b16 %v1981, %v1977
        %v2286 = vpack.c.b16 %v1982, %v1978
        %v2287 = vpack.c.b16 %v1983, %v1979
        %v2288 = vpack.c.b16 %v1984, %v1980
        %v2289 = vpack.c.b16 %v1989, %v1985
        %v2290 = vpack.c.b16 %v1990, %v1986
        %v2291 = vpack.c.b16 %v1991, %v1987
        %v2292 = vpack.c.b16 %v1992, %v1988
        %v2293 = vpack.c.b16 %v1997, %v1993
        %v2294 = vpack.c.b16 %v1998, %v1994
        %v2295 = vpack.c.b16 %v1999, %v1995
        %v2296 = vpack.c.b16 %v2000, %v1996
        %v2297 = vpack.c.b16 %v2005, %v2001
        %v2298 = vpack.c.b16 %v2006, %v2002
        %v2299 = vpack.c.b16 %v2007, %v2003
        %v2300 = vpack.c.b16 %v2008, %v2004
        %v2301 = vpack.c.b16 %v2013, %v2009
        %v2302 = vpack.c.b16 %v2014, %v2010
        %v2303 = vpack.c.b16 %v2015, %v2011
        %v2304 = vpack.c.b16 %v2016, %v2012
        %v2305 = vpack.c.b16 %v2021, %v2017
        %v2306 = vpack.c.b16 %v2022, %v2018
        %v2307 = vpack.c.b16 %v2023, %v2019
        %v2308 = vpack.c.b16 %v2024, %v2020
        %v2309 = vpack.c.b16 %v2029, %v2025
        %v2310 = vpack.c.b16 %v2030, %v2026
        %v2311 = vpack.c.b16 %v2031, %v2027
        %v2312 = vpack.c.b16 %v2032, %v2028
        %v2313 = vpack.c.b16 %v2037, %v2033
        %v2314 = vpack.c.b16 %v2038, %v2034
        %v2315 = vpack.c.b16 %v2039, %v2035
        %v2316 = vpack.c.b16 %v2040, %v2036
        %v2317 = vpack.c.b16 %v2045, %v2041
        %v2318 = vpack.c.b16 %v2046, %v2042
        %v2319 = vpack.c.b16 %v2047, %v2043
        %v2320 = vpack.c.b16 %v2048, %v2044
        %v2321 = vpack.c.b16 %v2053, %v2049
        %v2322 = vpack.c.b16 %v2054, %v2050
        %v2323 = vpack.c.b16 %v2055, %v2051
        %v2324 = vpack.c.b16 %v2056, %v2052
        %v2325 = vpack.c.b16 %v2061, %v2057
        %v2326 = vpack.c.b16 %v2062, %v2058
        %v2327 = vpack.c.b16 %v2063, %v2059
        %v2328 = vpack.c.b16 %v2064, %v2060
        %v2329 = vpack.c.b16 %v2069, %v2065
        %v2330 = vpack.c.b16 %v2070, %v2066
        %v2331 = vpack.c.b16 %v2071, %v2067
        %v2332 = vpack.c.b16 %v2072, %v2068
        %v2333 = vpack.c.b16 %v2077, %v2073
        %v2334 = vpack.c.b16 %v2078, %v2074
        %v2335 = vpack.c.b16 %v2079, %v2075
        %v2336 = vpack.c.b16 %v2080, %v2076
        %2593 = vmatpush.bf16.msra.mxu0 %v2109
        %2594 = vmatpush.bf16.msra.mxu0 %v2105
        %2595 = vmatpush.bf16.msra.mxu0 %v2101
        %2596 = vmatpush.bf16.msra.mxu0 %v2097
        %2597 = vmatpush.bf16.msra.mxu0 %v2093
        %2598 = vmatpush.bf16.msra.mxu0 %v2089
        %2599 = vmatpush.bf16.msra.mxu0 %v2085
        %2600 = vmatpush.bf16.msra.mxu0 %v2081
        %2601 = vmatmul.bf16.gmra.mxu0 %v1265
        %v2602 = vpop.f32.mrf.mxu0
        %v2603 = vadd.f32 %v1197, %v2602
        %v2604 = vpop.f32.mrf.mxu0
        %v2605 = vadd.f32 %v1197, %v2604
        %2606 = vmatmul.bf16.gmra.mxu0 %v1273
        %v2607 = vpop.f32.mrf.mxu0
        %v2608 = vadd.f32 %v1197, %v2607
        %v2609 = vpop.f32.mrf.mxu0
        %v2610 = vadd.f32 %v1197, %v2609
        %2611 = vmatmul.bf16.gmra.mxu0 %v1281
        %v2612 = vpop.f32.mrf.mxu0
        %v2613 = vadd.f32 %v1197, %v2612
        %v2614 = vpop.f32.mrf.mxu0
        %2615 = vdwg.mxu0
        %2616 = vmatpush.bf16.msra.mxu0 %v2141
        %2617 = vmatpush.bf16.msra.mxu0 %v2137
        %2618 = vmatpush.bf16.msra.mxu0 %v2133
        %2619 = vmatpush.bf16.msra.mxu0 %v2129
        %2620 = vmatpush.bf16.msra.mxu0 %v2125
        %2621 = vmatpush.bf16.msra.mxu0 %v2121
        %2622 = vmatpush.bf16.msra.mxu0 %v2117
        %2623 = vmatpush.bf16.msra.mxu0 %v2113
        %2624 = vmatmul.bf16.gmra.mxu0 %v1266
        %v2625 = vpop.f32.mrf.mxu0
        %v2626 = vadd.f32 %v2603, %v2625
        %v2627 = vpop.f32.mrf.mxu0
        %v2628 = vadd.f32 %v2605, %v2627
        %2629 = vmatmul.bf16.gmra.mxu0 %v1274
        %v2630 = vpop.f32.mrf.mxu0
        %v2631 = vadd.f32 %v2608, %v2630
        %v2632 = vpop.f32.mrf.mxu0
        %v2633 = vadd.f32 %v2610, %v2632
        %2634 = vmatmul.bf16.gmra.mxu0 %v1282
        %v2635 = vpop.f32.mrf.mxu0
        %v2636 = vadd.f32 %v2613, %v2635
        %v2637 = vpop.f32.mrf.mxu0
        %2638 = vdwg.mxu0
        %2639 = vmatpush.bf16.msra.mxu0 %v2173
        %2640 = vmatpush.bf16.msra.mxu0 %v2169
        %2641 = vmatpush.bf16.msra.mxu0 %v2165
        %2642 = vmatpush.bf16.msra.mxu0 %v2161
        %2643 = vmatpush.bf16.msra.mxu0 %v2157
        %2644 = vmatpush.bf16.msra.mxu0 %v2153
        %2645 = vmatpush.bf16.msra.mxu0 %v2149
        %2646 = vmatpush.bf16.msra.mxu0 %v2145
        %2647 = vmatmul.bf16.gmra.mxu0 %v1267
        %v2648 = vpop.f32.mrf.mxu0
        %v2649 = vadd.f32 %v2626, %v2648
        %v2650 = vpop.f32.mrf.mxu0
        %v2651 = vadd.f32 %v2628, %v2650
        %2652 = vmatmul.bf16.gmra.mxu0 %v1275
        %v2653 = vpop.f32.mrf.mxu0
        %v2654 = vadd.f32 %v2631, %v2653
        %v2655 = vpop.f32.mrf.mxu0
        %v2656 = vadd.f32 %v2633, %v2655
        %2657 = vmatmul.bf16.gmra.mxu0 %v1283
        %v2658 = vpop.f32.mrf.mxu0
        %v2659 = vadd.f32 %v2636, %v2658
        %v2660 = vpop.f32.mrf.mxu0
        %2661 = vdwg.mxu0
        %2662 = vmatpush.bf16.msra.mxu0 %v2205
        %2663 = vmatpush.bf16.msra.mxu0 %v2201
        %2664 = vmatpush.bf16.msra.mxu0 %v2197
        %2665 = vmatpush.bf16.msra.mxu0 %v2193
        %2666 = vmatpush.bf16.msra.mxu0 %v2189
        %2667 = vmatpush.bf16.msra.mxu0 %v2185
        %2668 = vmatpush.bf16.msra.mxu0 %v2181
        %2669 = vmatpush.bf16.msra.mxu0 %v2177
        %2670 = vmatmul.bf16.gmra.mxu0 %v1268
        %v2671 = vpop.f32.mrf.mxu0
        %v2672 = vadd.f32 %v2649, %v2671
        %v2673 = vpop.f32.mrf.mxu0
        %v2674 = vadd.f32 %v2651, %v2673
        %2675 = vmatmul.bf16.gmra.mxu0 %v1276
        %v2676 = vpop.f32.mrf.mxu0
        %v2677 = vadd.f32 %v2654, %v2676
        %v2678 = vpop.f32.mrf.mxu0
        %v2679 = vadd.f32 %v2656, %v2678
        %2680 = vmatmul.bf16.gmra.mxu0 %v1284
        %v2681 = vpop.f32.mrf.mxu0
        %v2682 = vadd.f32 %v2659, %v2681
        %v2683 = vpop.f32.mrf.mxu0
        %2684 = vdwg.mxu0
        %2685 = vmatpush.bf16.msra.mxu0 %v2237
        %2686 = vmatpush.bf16.msra.mxu0 %v2233
        %2687 = vmatpush.bf16.msra.mxu0 %v2229
        %2688 = vmatpush.bf16.msra.mxu0 %v2225
        %2689 = vmatpush.bf16.msra.mxu0 %v2221
        %2690 = vmatpush.bf16.msra.mxu0 %v2217
        %2691 = vmatpush.bf16.msra.mxu0 %v2213
        %2692 = vmatpush.bf16.msra.mxu0 %v2209
        %2693 = vmatmul.bf16.gmra.mxu0 %v1269
        %v2694 = vpop.f32.mrf.mxu0
        %v2695 = vadd.f32 %v2672, %v2694
        %v2696 = vpop.f32.mrf.mxu0
        %v2697 = vadd.f32 %v2674, %v2696
        %2698 = vmatmul.bf16.gmra.mxu0 %v1277
        %v2699 = vpop.f32.mrf.mxu0
        %v2700 = vadd.f32 %v2677, %v2699
        %v2701 = vpop.f32.mrf.mxu0
        %v2702 = vadd.f32 %v2679, %v2701
        %2703 = vmatmul.bf16.gmra.mxu0 %v1285
        %v2704 = vpop.f32.mrf.mxu0
        %v2705 = vadd.f32 %v2682, %v2704
        %v2706 = vpop.f32.mrf.mxu0
        %2707 = vdwg.mxu0
        %2708 = vmatpush.bf16.msra.mxu0 %v2269
        %2709 = vmatpush.bf16.msra.mxu0 %v2265
        %2710 = vmatpush.bf16.msra.mxu0 %v2261
        %2711 = vmatpush.bf16.msra.mxu0 %v2257
        %2712 = vmatpush.bf16.msra.mxu0 %v2253
        %2713 = vmatpush.bf16.msra.mxu0 %v2249
        %2714 = vmatpush.bf16.msra.mxu0 %v2245
        %2715 = vmatpush.bf16.msra.mxu0 %v2241
        %2716 = vmatmul.bf16.gmra.mxu0 %v1270
        %v2717 = vpop.f32.mrf.mxu0
        %v2718 = vadd.f32 %v2695, %v2717
        %v2719 = vpop.f32.mrf.mxu0
        %v2720 = vadd.f32 %v2697, %v2719
        %2721 = vmatmul.bf16.gmra.mxu0 %v1278
        %v2722 = vpop.f32.mrf.mxu0
        %v2723 = vadd.f32 %v2700, %v2722
        %v2724 = vpop.f32.mrf.mxu0
        %v2725 = vadd.f32 %v2702, %v2724
        %2726 = vmatmul.bf16.gmra.mxu0 %v1286
        %v2727 = vpop.f32.mrf.mxu0
        %v2728 = vadd.f32 %v2705, %v2727
        %v2729 = vpop.f32.mrf.mxu0
        %2730 = vdwg.mxu0
        %2731 = vmatpush.bf16.msra.mxu0 %v2301
        %2732 = vmatpush.bf16.msra.mxu0 %v2297
        %2733 = vmatpush.bf16.msra.mxu0 %v2293
        %2734 = vmatpush.bf16.msra.mxu0 %v2289
        %2735 = vmatpush.bf16.msra.mxu0 %v2285
        %2736 = vmatpush.bf16.msra.mxu0 %v2281
        %2737 = vmatpush.bf16.msra.mxu0 %v2277
        %2738 = vmatpush.bf16.msra.mxu0 %v2273
        %2739 = vmatmul.bf16.gmra.mxu0 %v1271
        %v2740 = vpop.f32.mrf.mxu0
        %v2741 = vadd.f32 %v2718, %v2740
        %v2742 = vpop.f32.mrf.mxu0
        %v2743 = vadd.f32 %v2720, %v2742
        %2744 = vmatmul.bf16.gmra.mxu0 %v1279
        %v2745 = vpop.f32.mrf.mxu0
        %v2746 = vadd.f32 %v2723, %v2745
        %v2747 = vpop.f32.mrf.mxu0
        %v2748 = vadd.f32 %v2725, %v2747
        %2749 = vmatmul.bf16.gmra.mxu0 %v1287
        %v2750 = vpop.f32.mrf.mxu0
        %v2751 = vadd.f32 %v2728, %v2750
        %v2752 = vpop.f32.mrf.mxu0
        %2753 = vdwg.mxu0
        %2754 = vmatpush.bf16.msra.mxu0 %v2333
        %2755 = vmatpush.bf16.msra.mxu0 %v2329
        %2756 = vmatpush.bf16.msra.mxu0 %v2325
        %2757 = vmatpush.bf16.msra.mxu0 %v2321
        %2758 = vmatpush.bf16.msra.mxu0 %v2317
        %2759 = vmatpush.bf16.msra.mxu0 %v2313
        %2760 = vmatpush.bf16.msra.mxu0 %v2309
        %2761 = vmatpush.bf16.msra.mxu0 %v2305
        %2762 = vmatmul.bf16.gmra.mxu0 %v1272
        %v2763 = vpop.f32.mrf.mxu0
        %v2764 = vadd.f32 %v2741, %v2763
        %v2765 = vpop.f32.mrf.mxu0
        %v2766 = vadd.f32 %v2743, %v2765
        %2767 = vmatmul.bf16.gmra.mxu0 %v1280
        %v2768 = vpop.f32.mrf.mxu0
        %v2769 = vadd.f32 %v2746, %v2768
        %v2770 = vpop.f32.mrf.mxu0
        %v2771 = vadd.f32 %v2748, %v2770
        %2772 = vmatmul.bf16.gmra.mxu0 %v1288
        %v2773 = vpop.f32.mrf.mxu0
        %v2774 = vadd.f32 %v2751, %v2773
        %v2775 = vpop.f32.mrf.mxu0
        %2776 = vdwg.mxu0
        %2777 = vmatpush.bf16.msra.mxu0 %v2110
        %2778 = vmatpush.bf16.msra.mxu0 %v2106
        %2779 = vmatpush.bf16.msra.mxu0 %v2102
        %2780 = vmatpush.bf16.msra.mxu0 %v2098
        %2781 = vmatpush.bf16.msra.mxu0 %v2094
        %2782 = vmatpush.bf16.msra.mxu0 %v2090
        %2783 = vmatpush.bf16.msra.mxu0 %v2086
        %2784 = vmatpush.bf16.msra.mxu0 %v2082
        %2785 = vmatmul.bf16.gmra.mxu0 %v1265
        %v2786 = vpop.f32.mrf.mxu0
        %v2787 = vadd.f32 %v1198, %v2786
        %v2788 = vpop.f32.mrf.mxu0
        %v2789 = vadd.f32 %v1198, %v2788
        %2790 = vmatmul.bf16.gmra.mxu0 %v1273
        %v2791 = vpop.f32.mrf.mxu0
        %v2792 = vadd.f32 %v1198, %v2791
        %v2793 = vpop.f32.mrf.mxu0
        %v2794 = vadd.f32 %v1198, %v2793
        %2795 = vmatmul.bf16.gmra.mxu0 %v1281
        %v2796 = vpop.f32.mrf.mxu0
        %v2797 = vadd.f32 %v1198, %v2796
        %v2798 = vpop.f32.mrf.mxu0
        %2799 = vdwg.mxu0
        %2800 = vmatpush.bf16.msra.mxu0 %v2142
        %2801 = vmatpush.bf16.msra.mxu0 %v2138
        %2802 = vmatpush.bf16.msra.mxu0 %v2134
        %2803 = vmatpush.bf16.msra.mxu0 %v2130
        %2804 = vmatpush.bf16.msra.mxu0 %v2126
        %2805 = vmatpush.bf16.msra.mxu0 %v2122
        %2806 = vmatpush.bf16.msra.mxu0 %v2118
        %2807 = vmatpush.bf16.msra.mxu0 %v2114
        %2808 = vmatmul.bf16.gmra.mxu0 %v1266
        %v2809 = vpop.f32.mrf.mxu0
        %v2810 = vadd.f32 %v2787, %v2809
        %v2811 = vpop.f32.mrf.mxu0
        %v2812 = vadd.f32 %v2789, %v2811
        %2813 = vmatmul.bf16.gmra.mxu0 %v1274
        %v2814 = vpop.f32.mrf.mxu0
        %v2815 = vadd.f32 %v2792, %v2814
        %v2816 = vpop.f32.mrf.mxu0
        %v2817 = vadd.f32 %v2794, %v2816
        %2818 = vmatmul.bf16.gmra.mxu0 %v1282
        %v2819 = vpop.f32.mrf.mxu0
        %v2820 = vadd.f32 %v2797, %v2819
        %v2821 = vpop.f32.mrf.mxu0
        %2822 = vdwg.mxu0
        %2823 = vmatpush.bf16.msra.mxu0 %v2174
        %2824 = vmatpush.bf16.msra.mxu0 %v2170
        %2825 = vmatpush.bf16.msra.mxu0 %v2166
        %2826 = vmatpush.bf16.msra.mxu0 %v2162
        %2827 = vmatpush.bf16.msra.mxu0 %v2158
        %2828 = vmatpush.bf16.msra.mxu0 %v2154
        %2829 = vmatpush.bf16.msra.mxu0 %v2150
        %2830 = vmatpush.bf16.msra.mxu0 %v2146
        %2831 = vmatmul.bf16.gmra.mxu0 %v1267
        %v2832 = vpop.f32.mrf.mxu0
        %v2833 = vadd.f32 %v2810, %v2832
        %v2834 = vpop.f32.mrf.mxu0
        %v2835 = vadd.f32 %v2812, %v2834
        %2836 = vmatmul.bf16.gmra.mxu0 %v1275
        %v2837 = vpop.f32.mrf.mxu0
        %v2838 = vadd.f32 %v2815, %v2837
        %v2839 = vpop.f32.mrf.mxu0
        %v2840 = vadd.f32 %v2817, %v2839
        %2841 = vmatmul.bf16.gmra.mxu0 %v1283
        %v2842 = vpop.f32.mrf.mxu0
        %v2843 = vadd.f32 %v2820, %v2842
        %v2844 = vpop.f32.mrf.mxu0
        %2845 = vdwg.mxu0
        %2846 = vmatpush.bf16.msra.mxu0 %v2206
        %2847 = vmatpush.bf16.msra.mxu0 %v2202
        %2848 = vmatpush.bf16.msra.mxu0 %v2198
        %2849 = vmatpush.bf16.msra.mxu0 %v2194
        %2850 = vmatpush.bf16.msra.mxu0 %v2190
        %2851 = vmatpush.bf16.msra.mxu0 %v2186
        %2852 = vmatpush.bf16.msra.mxu0 %v2182
        %2853 = vmatpush.bf16.msra.mxu0 %v2178
        %2854 = vmatmul.bf16.gmra.mxu0 %v1268
        %v2855 = vpop.f32.mrf.mxu0
        %v2856 = vadd.f32 %v2833, %v2855
        %v2857 = vpop.f32.mrf.mxu0
        %v2858 = vadd.f32 %v2835, %v2857
        %2859 = vmatmul.bf16.gmra.mxu0 %v1276
        %v2860 = vpop.f32.mrf.mxu0
        %v2861 = vadd.f32 %v2838, %v2860
        %v2862 = vpop.f32.mrf.mxu0
        %v2863 = vadd.f32 %v2840, %v2862
        %2864 = vmatmul.bf16.gmra.mxu0 %v1284
        %v2865 = vpop.f32.mrf.mxu0
        %v2866 = vadd.f32 %v2843, %v2865
        %v2867 = vpop.f32.mrf.mxu0
        %2868 = vdwg.mxu0
        %2869 = vmatpush.bf16.msra.mxu0 %v2238
        %2870 = vmatpush.bf16.msra.mxu0 %v2234
        %2871 = vmatpush.bf16.msra.mxu0 %v2230
        %2872 = vmatpush.bf16.msra.mxu0 %v2226
        %2873 = vmatpush.bf16.msra.mxu0 %v2222
        %2874 = vmatpush.bf16.msra.mxu0 %v2218
        %2875 = vmatpush.bf16.msra.mxu0 %v2214
        %2876 = vmatpush.bf16.msra.mxu0 %v2210
        %2877 = vmatmul.bf16.gmra.mxu0 %v1269
        %v2878 = vpop.f32.mrf.mxu0
        %v2879 = vadd.f32 %v2856, %v2878
        %v2880 = vpop.f32.mrf.mxu0
        %v2881 = vadd.f32 %v2858, %v2880
        %2882 = vmatmul.bf16.gmra.mxu0 %v1277
        %v2883 = vpop.f32.mrf.mxu0
        %v2884 = vadd.f32 %v2861, %v2883
        %v2885 = vpop.f32.mrf.mxu0
        %v2886 = vadd.f32 %v2863, %v2885
        %2887 = vmatmul.bf16.gmra.mxu0 %v1285
        %v2888 = vpop.f32.mrf.mxu0
        %v2889 = vadd.f32 %v2866, %v2888
        %v2890 = vpop.f32.mrf.mxu0
        %2891 = vdwg.mxu0
        %2892 = vmatpush.bf16.msra.mxu0 %v2270
        %2893 = vmatpush.bf16.msra.mxu0 %v2266
        %2894 = vmatpush.bf16.msra.mxu0 %v2262
        %2895 = vmatpush.bf16.msra.mxu0 %v2258
        %2896 = vmatpush.bf16.msra.mxu0 %v2254
        %2897 = vmatpush.bf16.msra.mxu0 %v2250
        %2898 = vmatpush.bf16.msra.mxu0 %v2246
        %2899 = vmatpush.bf16.msra.mxu0 %v2242
        %2900 = vmatmul.bf16.gmra.mxu0 %v1270
        %v2901 = vpop.f32.mrf.mxu0
        %v2902 = vadd.f32 %v2879, %v2901
        %v2903 = vpop.f32.mrf.mxu0
        %v2904 = vadd.f32 %v2881, %v2903
        %2905 = vmatmul.bf16.gmra.mxu0 %v1278
        %v2906 = vpop.f32.mrf.mxu0
        %v2907 = vadd.f32 %v2884, %v2906
        %v2908 = vpop.f32.mrf.mxu0
        %v2909 = vadd.f32 %v2886, %v2908
        %2910 = vmatmul.bf16.gmra.mxu0 %v1286
        %v2911 = vpop.f32.mrf.mxu0
        %v2912 = vadd.f32 %v2889, %v2911
        %v2913 = vpop.f32.mrf.mxu0
        %2914 = vdwg.mxu0
        %2915 = vmatpush.bf16.msra.mxu0 %v2302
        %2916 = vmatpush.bf16.msra.mxu0 %v2298
        %2917 = vmatpush.bf16.msra.mxu0 %v2294
        %2918 = vmatpush.bf16.msra.mxu0 %v2290
        %2919 = vmatpush.bf16.msra.mxu0 %v2286
        %2920 = vmatpush.bf16.msra.mxu0 %v2282
        %2921 = vmatpush.bf16.msra.mxu0 %v2278
        %2922 = vmatpush.bf16.msra.mxu0 %v2274
        %2923 = vmatmul.bf16.gmra.mxu0 %v1271
        %v2924 = vpop.f32.mrf.mxu0
        %v2925 = vadd.f32 %v2902, %v2924
        %v2926 = vpop.f32.mrf.mxu0
        %v2927 = vadd.f32 %v2904, %v2926
        %2928 = vmatmul.bf16.gmra.mxu0 %v1279
        %v2929 = vpop.f32.mrf.mxu0
        %v2930 = vadd.f32 %v2907, %v2929
        %v2931 = vpop.f32.mrf.mxu0
        %v2932 = vadd.f32 %v2909, %v2931
        %2933 = vmatmul.bf16.gmra.mxu0 %v1287
        %v2934 = vpop.f32.mrf.mxu0
        %v2935 = vadd.f32 %v2912, %v2934
        %v2936 = vpop.f32.mrf.mxu0
        %2937 = vdwg.mxu0
        %2938 = vmatpush.bf16.msra.mxu0 %v2334
        %2939 = vmatpush.bf16.msra.mxu0 %v2330
        %2940 = vmatpush.bf16.msra.mxu0 %v2326
        %2941 = vmatpush.bf16.msra.mxu0 %v2322
        %2942 = vmatpush.bf16.msra.mxu0 %v2318
        %2943 = vmatpush.bf16.msra.mxu0 %v2314
        %2944 = vmatpush.bf16.msra.mxu0 %v2310
        %2945 = vmatpush.bf16.msra.mxu0 %v2306
        %2946 = vmatmul.bf16.gmra.mxu0 %v1272
        %v2947 = vpop.f32.mrf.mxu0
        %v2948 = vadd.f32 %v2925, %v2947
        %v2949 = vpop.f32.mrf.mxu0
        %v2950 = vadd.f32 %v2927, %v2949
        %2951 = vmatmul.bf16.gmra.mxu0 %v1280
        %v2952 = vpop.f32.mrf.mxu0
        %v2953 = vadd.f32 %v2930, %v2952
        %v2954 = vpop.f32.mrf.mxu0
        %v2955 = vadd.f32 %v2932, %v2954
        %2956 = vmatmul.bf16.gmra.mxu0 %v1288
        %v2957 = vpop.f32.mrf.mxu0
        %v2958 = vadd.f32 %v2935, %v2957
        %v2959 = vpop.f32.mrf.mxu0
        %2960 = vdwg.mxu0
        %2961 = vmatpush.bf16.msra.mxu0 %v2111
        %2962 = vmatpush.bf16.msra.mxu0 %v2107
        %2963 = vmatpush.bf16.msra.mxu0 %v2103
        %2964 = vmatpush.bf16.msra.mxu0 %v2099
        %2965 = vmatpush.bf16.msra.mxu0 %v2095
        %2966 = vmatpush.bf16.msra.mxu0 %v2091
        %2967 = vmatpush.bf16.msra.mxu0 %v2087
        %2968 = vmatpush.bf16.msra.mxu0 %v2083
        %2969 = vmatmul.bf16.gmra.mxu0 %v1265
        %v2970 = vpop.f32.mrf.mxu0
        %v2971 = vadd.f32 %v1199, %v2970
        %v2972 = vpop.f32.mrf.mxu0
        %v2973 = vadd.f32 %v1199, %v2972
        %2974 = vmatmul.bf16.gmra.mxu0 %v1273
        %v2975 = vpop.f32.mrf.mxu0
        %v2976 = vadd.f32 %v1199, %v2975
        %v2977 = vpop.f32.mrf.mxu0
        %v2978 = vadd.f32 %v1199, %v2977
        %2979 = vmatmul.bf16.gmra.mxu0 %v1281
        %v2980 = vpop.f32.mrf.mxu0
        %v2981 = vadd.f32 %v1199, %v2980
        %v2982 = vpop.f32.mrf.mxu0
        %2983 = vdwg.mxu0
        %2984 = vmatpush.bf16.msra.mxu0 %v2143
        %2985 = vmatpush.bf16.msra.mxu0 %v2139
        %2986 = vmatpush.bf16.msra.mxu0 %v2135
        %2987 = vmatpush.bf16.msra.mxu0 %v2131
        %2988 = vmatpush.bf16.msra.mxu0 %v2127
        %2989 = vmatpush.bf16.msra.mxu0 %v2123
        %2990 = vmatpush.bf16.msra.mxu0 %v2119
        %2991 = vmatpush.bf16.msra.mxu0 %v2115
        %2992 = vmatmul.bf16.gmra.mxu0 %v1266
        %v2993 = vpop.f32.mrf.mxu0
        %v2994 = vadd.f32 %v2971, %v2993
        %v2995 = vpop.f32.mrf.mxu0
        %v2996 = vadd.f32 %v2973, %v2995
        %2997 = vmatmul.bf16.gmra.mxu0 %v1274
        %v2998 = vpop.f32.mrf.mxu0
        %v2999 = vadd.f32 %v2976, %v2998
        %v3000 = vpop.f32.mrf.mxu0
        %v3001 = vadd.f32 %v2978, %v3000
        %3002 = vmatmul.bf16.gmra.mxu0 %v1282
        %v3003 = vpop.f32.mrf.mxu0
        %v3004 = vadd.f32 %v2981, %v3003
        %v3005 = vpop.f32.mrf.mxu0
        %3006 = vdwg.mxu0
        %3007 = vmatpush.bf16.msra.mxu0 %v2175
        %3008 = vmatpush.bf16.msra.mxu0 %v2171
        %3009 = vmatpush.bf16.msra.mxu0 %v2167
        %3010 = vmatpush.bf16.msra.mxu0 %v2163
        %3011 = vmatpush.bf16.msra.mxu0 %v2159
        %3012 = vmatpush.bf16.msra.mxu0 %v2155
        %3013 = vmatpush.bf16.msra.mxu0 %v2151
        %3014 = vmatpush.bf16.msra.mxu0 %v2147
        %3015 = vmatmul.bf16.gmra.mxu0 %v1267
        %v3016 = vpop.f32.mrf.mxu0
        %v3017 = vadd.f32 %v2994, %v3016
        %v3018 = vpop.f32.mrf.mxu0
        %v3019 = vadd.f32 %v2996, %v3018
        %3020 = vmatmul.bf16.gmra.mxu0 %v1275
        %v3021 = vpop.f32.mrf.mxu0
        %v3022 = vadd.f32 %v2999, %v3021
        %v3023 = vpop.f32.mrf.mxu0
        %v3024 = vadd.f32 %v3001, %v3023
        %3025 = vmatmul.bf16.gmra.mxu0 %v1283
        %v3026 = vpop.f32.mrf.mxu0
        %v3027 = vadd.f32 %v3004, %v3026
        %v3028 = vpop.f32.mrf.mxu0
        %3029 = vdwg.mxu0
        %3030 = vmatpush.bf16.msra.mxu0 %v2207
        %3031 = vmatpush.bf16.msra.mxu0 %v2203
        %3032 = vmatpush.bf16.msra.mxu0 %v2199
        %3033 = vmatpush.bf16.msra.mxu0 %v2195
        %3034 = vmatpush.bf16.msra.mxu0 %v2191
        %3035 = vmatpush.bf16.msra.mxu0 %v2187
        %3036 = vmatpush.bf16.msra.mxu0 %v2183
        %3037 = vmatpush.bf16.msra.mxu0 %v2179
        %3038 = vmatmul.bf16.gmra.mxu0 %v1268
        %v3039 = vpop.f32.mrf.mxu0
        %v3040 = vadd.f32 %v3017, %v3039
        %v3041 = vpop.f32.mrf.mxu0
        %v3042 = vadd.f32 %v3019, %v3041
        %3043 = vmatmul.bf16.gmra.mxu0 %v1276
        %v3044 = vpop.f32.mrf.mxu0
        %v3045 = vadd.f32 %v3022, %v3044
        %v3046 = vpop.f32.mrf.mxu0
        %v3047 = vadd.f32 %v3024, %v3046
        %3048 = vmatmul.bf16.gmra.mxu0 %v1284
        %v3049 = vpop.f32.mrf.mxu0
        %v3050 = vadd.f32 %v3027, %v3049
        %v3051 = vpop.f32.mrf.mxu0
        %3052 = vdwg.mxu0
        %3053 = vmatpush.bf16.msra.mxu0 %v2239
        %3054 = vmatpush.bf16.msra.mxu0 %v2235
        %3055 = vmatpush.bf16.msra.mxu0 %v2231
        %3056 = vmatpush.bf16.msra.mxu0 %v2227
        %3057 = vmatpush.bf16.msra.mxu0 %v2223
        %3058 = vmatpush.bf16.msra.mxu0 %v2219
        %3059 = vmatpush.bf16.msra.mxu0 %v2215
        %3060 = vmatpush.bf16.msra.mxu0 %v2211
        %3061 = vmatmul.bf16.gmra.mxu0 %v1269
        %v3062 = vpop.f32.mrf.mxu0
        %v3063 = vadd.f32 %v3040, %v3062
        %v3064 = vpop.f32.mrf.mxu0
        %v3065 = vadd.f32 %v3042, %v3064
        %3066 = vmatmul.bf16.gmra.mxu0 %v1277
        %v3067 = vpop.f32.mrf.mxu0
        %v3068 = vadd.f32 %v3045, %v3067
        %v3069 = vpop.f32.mrf.mxu0
        %v3070 = vadd.f32 %v3047, %v3069
        %3071 = vmatmul.bf16.gmra.mxu0 %v1285
        %v3072 = vpop.f32.mrf.mxu0
        %v3073 = vadd.f32 %v3050, %v3072
        %v3074 = vpop.f32.mrf.mxu0
        %3075 = vdwg.mxu0
        %3076 = vmatpush.bf16.msra.mxu0 %v2271
        %3077 = vmatpush.bf16.msra.mxu0 %v2267
        %3078 = vmatpush.bf16.msra.mxu0 %v2263
        %3079 = vmatpush.bf16.msra.mxu0 %v2259
        %3080 = vmatpush.bf16.msra.mxu0 %v2255
        %3081 = vmatpush.bf16.msra.mxu0 %v2251
        %3082 = vmatpush.bf16.msra.mxu0 %v2247
        %3083 = vmatpush.bf16.msra.mxu0 %v2243
        %3084 = vmatmul.bf16.gmra.mxu0 %v1270
        %v3085 = vpop.f32.mrf.mxu0
        %v3086 = vadd.f32 %v3063, %v3085
        %v3087 = vpop.f32.mrf.mxu0
        %v3088 = vadd.f32 %v3065, %v3087
        %3089 = vmatmul.bf16.gmra.mxu0 %v1278
        %v3090 = vpop.f32.mrf.mxu0
        %v3091 = vadd.f32 %v3068, %v3090
        %v3092 = vpop.f32.mrf.mxu0
        %v3093 = vadd.f32 %v3070, %v3092
        %3094 = vmatmul.bf16.gmra.mxu0 %v1286
        %v3095 = vpop.f32.mrf.mxu0
        %v3096 = vadd.f32 %v3073, %v3095
        %v3097 = vpop.f32.mrf.mxu0
        %3098 = vdwg.mxu0
        %3099 = vmatpush.bf16.msra.mxu0 %v2303
        %3100 = vmatpush.bf16.msra.mxu0 %v2299
        %3101 = vmatpush.bf16.msra.mxu0 %v2295
        %3102 = vmatpush.bf16.msra.mxu0 %v2291
        %3103 = vmatpush.bf16.msra.mxu0 %v2287
        %3104 = vmatpush.bf16.msra.mxu0 %v2283
        %3105 = vmatpush.bf16.msra.mxu0 %v2279
        %3106 = vmatpush.bf16.msra.mxu0 %v2275
        %3107 = vmatmul.bf16.gmra.mxu0 %v1271
        %v3108 = vpop.f32.mrf.mxu0
        %v3109 = vadd.f32 %v3086, %v3108
        %v3110 = vpop.f32.mrf.mxu0
        %v3111 = vadd.f32 %v3088, %v3110
        %3112 = vmatmul.bf16.gmra.mxu0 %v1279
        %v3113 = vpop.f32.mrf.mxu0
        %v3114 = vadd.f32 %v3091, %v3113
        %v3115 = vpop.f32.mrf.mxu0
        %v3116 = vadd.f32 %v3093, %v3115
        %3117 = vmatmul.bf16.gmra.mxu0 %v1287
        %v3118 = vpop.f32.mrf.mxu0
        %v3119 = vadd.f32 %v3096, %v3118
        %v3120 = vpop.f32.mrf.mxu0
        %3121 = vdwg.mxu0
        %3122 = vmatpush.bf16.msra.mxu0 %v2335
        %3123 = vmatpush.bf16.msra.mxu0 %v2331
        %3124 = vmatpush.bf16.msra.mxu0 %v2327
        %3125 = vmatpush.bf16.msra.mxu0 %v2323
        %3126 = vmatpush.bf16.msra.mxu0 %v2319
        %3127 = vmatpush.bf16.msra.mxu0 %v2315
        %3128 = vmatpush.bf16.msra.mxu0 %v2311
        %3129 = vmatpush.bf16.msra.mxu0 %v2307
        %3130 = vmatmul.bf16.gmra.mxu0 %v1272
        %v3131 = vpop.f32.mrf.mxu0
        %v3132 = vadd.f32 %v3109, %v3131
        %v3133 = vpop.f32.mrf.mxu0
        %v3134 = vadd.f32 %v3111, %v3133
        %3135 = vmatmul.bf16.gmra.mxu0 %v1280
        %v3136 = vpop.f32.mrf.mxu0
        %v3137 = vadd.f32 %v3114, %v3136
        %v3138 = vpop.f32.mrf.mxu0
        %v3139 = vadd.f32 %v3116, %v3138
        %3140 = vmatmul.bf16.gmra.mxu0 %v1288
        %v3141 = vpop.f32.mrf.mxu0
        %v3142 = vadd.f32 %v3119, %v3141
        %v3143 = vpop.f32.mrf.mxu0
        %3144 = vdwg.mxu0
        %3145 = vmatpush.bf16.msra.mxu0 %v2112
        %3146 = vmatpush.bf16.msra.mxu0 %v2108
        %3147 = vmatpush.bf16.msra.mxu0 %v2104
        %3148 = vmatpush.bf16.msra.mxu0 %v2100
        %3149 = vmatpush.bf16.msra.mxu0 %v2096
        %3150 = vmatpush.bf16.msra.mxu0 %v2092
        %3151 = vmatpush.bf16.msra.mxu0 %v2088
        %3152 = vmatpush.bf16.msra.mxu0 %v2084
        %3153 = vmatmul.bf16.gmra.mxu0 %v1265
        %v3154 = vpop.f32.mrf.mxu0
        %v3155 = vadd.f32 %v1200, %v3154
        %v3156 = vpop.f32.mrf.mxu0
        %v3157 = vadd.f32 %v1200, %v3156
        %3158 = vmatmul.bf16.gmra.mxu0 %v1273
        %v3159 = vpop.f32.mrf.mxu0
        %v3160 = vadd.f32 %v1200, %v3159
        %v3161 = vpop.f32.mrf.mxu0
        %v3162 = vadd.f32 %v1200, %v3161
        %3163 = vmatmul.bf16.gmra.mxu0 %v1281
        %v3164 = vpop.f32.mrf.mxu0
        %v3165 = vadd.f32 %v1200, %v3164
        %v3166 = vpop.f32.mrf.mxu0
        %3167 = vdwg.mxu0
        %3168 = vmatpush.bf16.msra.mxu0 %v2144
        %3169 = vmatpush.bf16.msra.mxu0 %v2140
        %3170 = vmatpush.bf16.msra.mxu0 %v2136
        %3171 = vmatpush.bf16.msra.mxu0 %v2132
        %3172 = vmatpush.bf16.msra.mxu0 %v2128
        %3173 = vmatpush.bf16.msra.mxu0 %v2124
        %3174 = vmatpush.bf16.msra.mxu0 %v2120
        %3175 = vmatpush.bf16.msra.mxu0 %v2116
        %3176 = vmatmul.bf16.gmra.mxu0 %v1266
        %v3177 = vpop.f32.mrf.mxu0
        %v3178 = vadd.f32 %v3155, %v3177
        %v3179 = vpop.f32.mrf.mxu0
        %v3180 = vadd.f32 %v3157, %v3179
        %3181 = vmatmul.bf16.gmra.mxu0 %v1274
        %v3182 = vpop.f32.mrf.mxu0
        %v3183 = vadd.f32 %v3160, %v3182
        %v3184 = vpop.f32.mrf.mxu0
        %v3185 = vadd.f32 %v3162, %v3184
        %3186 = vmatmul.bf16.gmra.mxu0 %v1282
        %v3187 = vpop.f32.mrf.mxu0
        %v3188 = vadd.f32 %v3165, %v3187
        %v3189 = vpop.f32.mrf.mxu0
        %3190 = vdwg.mxu0
        %3191 = vmatpush.bf16.msra.mxu0 %v2176
        %3192 = vmatpush.bf16.msra.mxu0 %v2172
        %3193 = vmatpush.bf16.msra.mxu0 %v2168
        %3194 = vmatpush.bf16.msra.mxu0 %v2164
        %3195 = vmatpush.bf16.msra.mxu0 %v2160
        %3196 = vmatpush.bf16.msra.mxu0 %v2156
        %3197 = vmatpush.bf16.msra.mxu0 %v2152
        %3198 = vmatpush.bf16.msra.mxu0 %v2148
        %3199 = vmatmul.bf16.gmra.mxu0 %v1267
        %v3200 = vpop.f32.mrf.mxu0
        %v3201 = vadd.f32 %v3178, %v3200
        %v3202 = vpop.f32.mrf.mxu0
        %v3203 = vadd.f32 %v3180, %v3202
        %3204 = vmatmul.bf16.gmra.mxu0 %v1275
        %v3205 = vpop.f32.mrf.mxu0
        %v3206 = vadd.f32 %v3183, %v3205
        %v3207 = vpop.f32.mrf.mxu0
        %v3208 = vadd.f32 %v3185, %v3207
        %3209 = vmatmul.bf16.gmra.mxu0 %v1283
        %v3210 = vpop.f32.mrf.mxu0
        %v3211 = vadd.f32 %v3188, %v3210
        %v3212 = vpop.f32.mrf.mxu0
        %3213 = vdwg.mxu0
        %3214 = vmatpush.bf16.msra.mxu0 %v2208
        %3215 = vmatpush.bf16.msra.mxu0 %v2204
        %3216 = vmatpush.bf16.msra.mxu0 %v2200
        %3217 = vmatpush.bf16.msra.mxu0 %v2196
        %3218 = vmatpush.bf16.msra.mxu0 %v2192
        %3219 = vmatpush.bf16.msra.mxu0 %v2188
        %3220 = vmatpush.bf16.msra.mxu0 %v2184
        %3221 = vmatpush.bf16.msra.mxu0 %v2180
        %3222 = vmatmul.bf16.gmra.mxu0 %v1268
        %v3223 = vpop.f32.mrf.mxu0
        %v3224 = vadd.f32 %v3201, %v3223
        %v3225 = vpop.f32.mrf.mxu0
        %v3226 = vadd.f32 %v3203, %v3225
        %3227 = vmatmul.bf16.gmra.mxu0 %v1276
        %v3228 = vpop.f32.mrf.mxu0
        %v3229 = vadd.f32 %v3206, %v3228
        %v3230 = vpop.f32.mrf.mxu0
        %v3231 = vadd.f32 %v3208, %v3230
        %3232 = vmatmul.bf16.gmra.mxu0 %v1284
        %v3233 = vpop.f32.mrf.mxu0
        %v3234 = vadd.f32 %v3211, %v3233
        %v3235 = vpop.f32.mrf.mxu0
        %3236 = vdwg.mxu0
        %3237 = vmatpush.bf16.msra.mxu0 %v2240
        %3238 = vmatpush.bf16.msra.mxu0 %v2236
        %3239 = vmatpush.bf16.msra.mxu0 %v2232
        %3240 = vmatpush.bf16.msra.mxu0 %v2228
        %3241 = vmatpush.bf16.msra.mxu0 %v2224
        %3242 = vmatpush.bf16.msra.mxu0 %v2220
        %3243 = vmatpush.bf16.msra.mxu0 %v2216
        %3244 = vmatpush.bf16.msra.mxu0 %v2212
        %3245 = vmatmul.bf16.gmra.mxu0 %v1269
        %v3246 = vpop.f32.mrf.mxu0
        %v3247 = vadd.f32 %v3224, %v3246
        %v3248 = vpop.f32.mrf.mxu0
        %v3249 = vadd.f32 %v3226, %v3248
        %3250 = vmatmul.bf16.gmra.mxu0 %v1277
        %v3251 = vpop.f32.mrf.mxu0
        %v3252 = vadd.f32 %v3229, %v3251
        %v3253 = vpop.f32.mrf.mxu0
        %v3254 = vadd.f32 %v3231, %v3253
        %3255 = vmatmul.bf16.gmra.mxu0 %v1285
        %v3256 = vpop.f32.mrf.mxu0
        %v3257 = vadd.f32 %v3234, %v3256
        %v3258 = vpop.f32.mrf.mxu0
        %3259 = vdwg.mxu0
        %3260 = vmatpush.bf16.msra.mxu0 %v2272
        %3261 = vmatpush.bf16.msra.mxu0 %v2268
        %3262 = vmatpush.bf16.msra.mxu0 %v2264
        %3263 = vmatpush.bf16.msra.mxu0 %v2260
        %3264 = vmatpush.bf16.msra.mxu0 %v2256
        %3265 = vmatpush.bf16.msra.mxu0 %v2252
        %3266 = vmatpush.bf16.msra.mxu0 %v2248
        %3267 = vmatpush.bf16.msra.mxu0 %v2244
        %3268 = vmatmul.bf16.gmra.mxu0 %v1270
        %v3269 = vpop.f32.mrf.mxu0
        %v3270 = vadd.f32 %v3247, %v3269
        %v3271 = vpop.f32.mrf.mxu0
        %v3272 = vadd.f32 %v3249, %v3271
        %3273 = vmatmul.bf16.gmra.mxu0 %v1278
        %v3274 = vpop.f32.mrf.mxu0
        %v3275 = vadd.f32 %v3252, %v3274
        %v3276 = vpop.f32.mrf.mxu0
        %v3277 = vadd.f32 %v3254, %v3276
        %3278 = vmatmul.bf16.gmra.mxu0 %v1286
        %v3279 = vpop.f32.mrf.mxu0
        %v3280 = vadd.f32 %v3257, %v3279
        %v3281 = vpop.f32.mrf.mxu0
        %3282 = vdwg.mxu0
        %3283 = vmatpush.bf16.msra.mxu0 %v2304
        %3284 = vmatpush.bf16.msra.mxu0 %v2300
        %3285 = vmatpush.bf16.msra.mxu0 %v2296
        %3286 = vmatpush.bf16.msra.mxu0 %v2292
        %3287 = vmatpush.bf16.msra.mxu0 %v2288
        %3288 = vmatpush.bf16.msra.mxu0 %v2284
        %3289 = vmatpush.bf16.msra.mxu0 %v2280
        %3290 = vmatpush.bf16.msra.mxu0 %v2276
        %3291 = vmatmul.bf16.gmra.mxu0 %v1271
        %v3292 = vpop.f32.mrf.mxu0
        %v3293 = vadd.f32 %v3270, %v3292
        %v3294 = vpop.f32.mrf.mxu0
        %v3295 = vadd.f32 %v3272, %v3294
        %3296 = vmatmul.bf16.gmra.mxu0 %v1279
        %v3297 = vpop.f32.mrf.mxu0
        %v3298 = vadd.f32 %v3275, %v3297
        %v3299 = vpop.f32.mrf.mxu0
        %v3300 = vadd.f32 %v3277, %v3299
        %3301 = vmatmul.bf16.gmra.mxu0 %v1287
        %v3302 = vpop.f32.mrf.mxu0
        %v3303 = vadd.f32 %v3280, %v3302
        %v3304 = vpop.f32.mrf.mxu0
        %3305 = vdwg.mxu0
        %3306 = vmatpush.bf16.msra.mxu0 %v2336
        %3307 = vmatpush.bf16.msra.mxu0 %v2332
        %3308 = vmatpush.bf16.msra.mxu0 %v2328
        %3309 = vmatpush.bf16.msra.mxu0 %v2324
        %3310 = vmatpush.bf16.msra.mxu0 %v2320
        %3311 = vmatpush.bf16.msra.mxu0 %v2316
        %3312 = vmatpush.bf16.msra.mxu0 %v2312
        %3313 = vmatpush.bf16.msra.mxu0 %v2308
        %3314 = vmatmul.bf16.gmra.mxu0 %v1272
        %v3315 = vpop.f32.mrf.mxu0
        %v3316 = vadd.f32 %v3293, %v3315
        %v3317 = vpop.f32.mrf.mxu0
        %v3318 = vadd.f32 %v3295, %v3317
        %3319 = vmatmul.bf16.gmra.mxu0 %v1280
        %v3320 = vpop.f32.mrf.mxu0
        %v3321 = vadd.f32 %v3298, %v3320
        %v3322 = vpop.f32.mrf.mxu0
        %v3323 = vadd.f32 %v3300, %v3322
        %3324 = vmatmul.bf16.gmra.mxu0 %v1288
        %v3325 = vpop.f32.mrf.mxu0
        %v3326 = vadd.f32 %v3303, %v3325
        %v3327 = vpop.f32.mrf.mxu0
        %3328 = vdwg.mxu0
        %v3329 = vmax.f32 %v2764, 0.0
        %v3330 = vmax.f32 %v2948, 0.0
        %v3331 = vmax.f32 %v3132, 0.0
        %v3332 = vmax.f32 %v3316, 0.0
        %v3333 = vmax.f32 %v2766, 0.0
        %v3334 = vmax.f32 %v2950, 0.0
        %v3335 = vmax.f32 %v3134, 0.0
        %v3336 = vmax.f32 %v3318, 0.0
        %v3337 = vmax.f32 %v2769, 0.0
        %v3338 = vmax.f32 %v2953, 0.0
        %v3339 = vmax.f32 %v3137, 0.0
        %v3340 = vmax.f32 %v3321, 0.0
        %v3341 = vmax.f32 %v2771, 0.0
        %v3342 = vmax.f32 %v2955, 0.0
        %v3343 = vmax.f32 %v3139, 0.0
        %v3344 = vmax.f32 %v3323, 0.0
        %v3345 = vmax.f32 %v2774, 0.0
        %v3346 = vmax.f32 %v2958, 0.0
        %v3347 = vmax.f32 %v3142, 0.0
        %v3348 = vmax.f32 %v3326, 0.0
        %v3349 = vld [vmem:[#allocation11] sm:$0xf]
        %v3351 = vperm.slane %v3349, 0
        %v3352 = vperm.slane %v3349, 1
        %v3353 = vperm.slane %v3349, 2
        %v3354 = vperm.slane %v3349, 3
        %v3359 = vmul.f32 %v3329, %v3351
        %v3360 = vmul.f32 %v3330, %v3352
        %v3361 = vmul.f32 %v3331, %v3353
        %v3362 = vmul.f32 %v3332, %v3354
        %v3363 = vmul.f32 %v3333, %v3351
        %v3364 = vmul.f32 %v3334, %v3352
        %v3365 = vmul.f32 %v3335, %v3353
        %v3366 = vmul.f32 %v3336, %v3354
        %v3367 = vmul.f32 %v3337, %v3351
        %v3368 = vmul.f32 %v3338, %v3352
        %v3369 = vmul.f32 %v3339, %v3353
        %v3370 = vmul.f32 %v3340, %v3354
        %v3371 = vmul.f32 %v3341, %v3351
        %v3372 = vmul.f32 %v3342, %v3352
        %v3373 = vmul.f32 %v3343, %v3353
        %v3374 = vmul.f32 %v3344, %v3354
        %v3375 = vmul.f32 %v3345, %v3351
        %v3376 = vmul.f32 %v3346, %v3352
        %v3377 = vmul.f32 %v3347, %v3353
        %v3378 = vmul.f32 %v3348, %v3354
        %v3379 = vadd.f32 %v3359, %v3360
        %v3380 = vadd.f32 %v3379, %v3361
        %v3381 = vadd.f32 %v3380, %v3362
        %3382 = vadd.xlane.f32.xlu0 %v3381
        %v3383 = vpop.xlane.xlu0 %3382
        %v3384 = vadd.f32 %v3363, %v3364
        %v3385 = vadd.f32 %v3384, %v3365
        %v3386 = vadd.f32 %v3385, %v3366
        %3387 = vadd.xlane.f32.xlu0 %v3386
        %v3388 = vpop.xlane.xlu0 %3387
        %v3389 = vadd.f32 %v3367, %v3368
        %v3390 = vadd.f32 %v3389, %v3369
        %v3391 = vadd.f32 %v3390, %v3370
        %3392 = vadd.xlane.f32.xlu0 %v3391
        %v3393 = vpop.xlane.xlu0 %3392
        %v3394 = vadd.f32 %v3371, %v3372
        %v3395 = vadd.f32 %v3394, %v3373
        %v3396 = vadd.f32 %v3395, %v3374
        %3397 = vadd.xlane.f32.xlu0 %v3396
        %v3398 = vpop.xlane.xlu0 %3397
        %v3399 = vadd.f32 %v3375, %v3376
        %v3400 = vadd.f32 %v3399, %v3377
        %v3401 = vadd.f32 %v3400, %v3378
        %3402 = vadd.xlane.f32.xlu0 %v3401
        %v3403 = vpop.xlane.xlu0 %3402
        %s3404 = sld [smem:[#allocation2]]
        %v3405 = vstv %s3404
        %v3406 = vadd.f32 %v3383, %v3405
        %v3407 = vadd.f32 %v3388, %v3405
        %v3408 = vadd.f32 %v3393, %v3405
        %v3409 = vadd.f32 %v3398, %v3405
        %v3410 = vadd.f32 %v3403, %v3405
        %vm3411 = vcmask 7168
        %3412 = vst.msk [vmem:[%s429] sm:$0xff] %vm3411, %v3406
        %3413 = vst.msk [vmem:[%s429 + $0x8] sm:$0xff] %vm3411, %v3407
        %3414 = vst.msk [vmem:[%s429 + $0x10] sm:$0xff] %vm3411, %v3408
        %3415 = vst.msk [vmem:[%s429 + $0x18] sm:$0xff] %vm3411, %v3409
        %3416 = vst.msk [vmem:[%s429 + $0x20] sm:$0xff] %vm3411, %v3410
        %s3417 = smul.u32 5, %s28
        %p3418 = scmp.lt.s32.totalorder %s3417, 9
        %s3419 = scalar_select %p3418, %s3417, 9
        %s3420 = smul.addr %s3419, 8
        %s3421 = scalar_lea.vmem %s8, %s3420
        // Predicated region
        $region77: #{tpu_custom_call.1} parent=51 // pred_check
          %p3422 = pneg %p224
        $region78: #{tpu_custom_call.1} parent=51 // pred_check_branch
          %3424 = sbr.rel (%p3422) target = $region80
        $region79: #{tpu_custom_call.1} parent=51 // pred_region
          %s3425 = smul.u32 5, %s28
        $region80: #{tpu_custom_call.1} parent=51 // pred_fallthru
          _
      $region52: #{tpu_custom_call.1} parent=5 // pred_fallthru
        _
      %p3426 = scmp.le.s32.totalorder 2, %s23
      // Predicated region
      $region81: #{tpu_custom_call.1} parent=5 // pred_check
        %p3427 = pneg %p3426
      $region82: #{tpu_custom_call.1} parent=5 // pred_check_branch
        %3429 = sbr.rel (%p3427) target = $region84
      $region83: #{tpu_custom_call.1} parent=5 // pred_region
        %s3430 = ssub.s32 %s23, 2
        // Predicated region
        $region85: #{tpu_custom_call.1} parent=83 // pred_check
          %p3431 = pneg %p230
        $region86: #{tpu_custom_call.1} parent=83 // pred_check_branch
          %3433 = sbr.rel (%p3431) target = $region88
        $region87: #{tpu_custom_call.1} parent=83 // pred_region
          %s3434 = smul.u32 5, %s29
          %p3435 = scmp.lt.s32.totalorder %s3434, 9
          %s3436 = scalar_select %p3435, %s3434, 9
          %s3437 = smul.addr %s3436, 8
          %s3438 = scalar_lea.vmem %s8, %s3437
        $region88: #{tpu_custom_call.1} parent=83 // pred_fallthru
          _
      $region84: #{tpu_custom_call.1} parent=5 // pred_fallthru
        _
    $region6: #{tpu_custom_call.1} parent=1 // loop_footer
      %s27 = sadd.s32 1, %s23
    $region7: #{tpu_custom_call.1} parent=1 // loop_footer_branch
      %22 = sbr.rel target = $region3
    $region8: #{tpu_custom_call.1} parent=1 // loop_exit
      _
    %3439 = vsyncpa [#allocation4], 1
    %s3440 = scalar_lea.sflag [#allocation4], 1
    %3441 = vsyncpa %s3440, 1
    %3442 = vsyncpa [#allocation6], 1
    %s3443 = scalar_lea.sflag [#allocation6], 1
    %3444 = vsyncpa %s3443, 1
    %3445 = vsyncpa [#allocation9], 1
    %3446 = vsyncpa [#allocation12], 1

</llo_original>
